<compile_context>
chip_gen: v7x
topology: tpu7x:2x2x1
jax: 0.10.0
libtpu: 0.0.40
codegen_flags: <defaults>
</compile_context>

<pallas_src>
import functools

import jax
import jax.numpy as jnp
from jax import lax
from jax.experimental import pallas as pl
from jax.experimental.pallas import tpu as pltpu

STATE_DIM = 3
ACTION_DIM = 2
H1 = 1024
H2 = 512
OUT = 2 * ACTION_DIM  # 4


def _cdiv(a, b):
    return -(-a // b)


def _round_up(v, m):
    return _cdiv(v, m) * m


def _fc1_compute_dtype():
    # bf16 elementwise only where the VPU has a native bf16 path (v6e / v7x).
    try:
        kind = jax.devices()[0].device_kind.lower()
    except Exception:
        return jnp.bfloat16
    if any(tag in kind for tag in ("v2", "v3", "v4", "v5")):
        return jnp.float32
    return jnp.bfloat16


def policy_net_kernel(x_ref, w1_ref, b1_ref, w2_ref, b2_ref, w3_ref, b3_ref, out_ref):
    # ---- fc1 + ReLU: K=3 contraction -> VPU broadcast-FMAs (skip the MXU) ----
    # Elementwise dtype follows w1/b1 (bf16 on v6e/v7x, f32 on v5e).
    cdt = w1_ref.dtype
    x = x_ref[...]                                   # (TB, 3)  f32
    w1 = w1_ref[...]                                 # (3, H1)  cdt
    x0 = x[:, 0:1].astype(cdt)
    x1 = x[:, 1:2].astype(cdt)
    x2 = x[:, 2:3].astype(cdt)
    h1 = b1_ref[...] + x0 * w1[0:1, :]
    h1 = h1 + x1 * w1[1:2, :]
    h1 = h1 + x2 * w1[2:3, :]
    h1 = jnp.maximum(h1, 0.0).astype(jnp.bfloat16)   # no-op cast when cdt is bf16

    # ---- fc2 + ReLU: dominant matmul, bf16 operands on the MXU, f32 accumulation ----
    h2 = jnp.dot(h1, w2_ref[...], preferred_element_type=jnp.float32) + b2_ref[...]
    h2 = jnp.maximum(h2, 0.0).astype(jnp.bfloat16)

    # ---- fc3 ----
    y = jnp.dot(h2, w3_ref[...], preferred_element_type=jnp.float32) + b3_ref[...]

    # torch.cat((y[:, :mid], softplus(y[:, mid:]) + 1e-5), dim=1) via a lane mask.
    middle = OUT // 2
    col = lax.broadcasted_iota(jnp.int32, y.shape, 1)
    softplus = jnp.logaddexp(0.0, y)                 # numerically stable softplus
    out_ref[...] = jnp.where(col < middle, y, softplus + 1e-5)


@functools.partial(jax.jit, static_argnames=("tb",))
def policy_net_forward(x, params, tb=1024):
    w1, b1, w2, b2, w3, b3 = params
    B = x.shape[0]

    # Choose the number of grid steps first (minimizes padding waste for B just above
    # a multiple of tb), force >=2 steps for large B so both v7x cores get work, then
    # derive a sublane-aligned batch tile.
    steps = max(1, _cdiv(B, tb))
    if B >= 512:
        steps = max(steps, 2)
    TB = _round_up(_cdiv(B, steps), 8)
    Bp = _round_up(B, TB)
    if Bp != B:
        x = jnp.pad(x, ((0, Bp - B), (0, 0)))
    grid = (Bp // TB,)

    const = lambda i: (0, 0)  # weights/biases: same block every step -> VMEM-resident
    out = pl.pallas_call(
        policy_net_kernel,
        out_shape=jax.ShapeDtypeStruct((Bp, OUT), jnp.float32),
        grid=grid,
        in_specs=[
            pl.BlockSpec((TB, STATE_DIM), lambda i: (i, 0)),
            pl.BlockSpec((STATE_DIM, H1), const),
            pl.BlockSpec((1, H1), const),
            pl.BlockSpec((H1, H2), const),
            pl.BlockSpec((1, H2), const),
            pl.BlockSpec((H2, OUT), const),
            pl.BlockSpec((1, OUT), const),
        ],
        out_specs=pl.BlockSpec((TB, OUT), lambda i: (i, 0)),
        compiler_params=pltpu.CompilerParams(
            dimension_semantics=("parallel",),
            vmem_limit_bytes=48 << 20,   # fits the v7x 64 MiB/TC VMEM with headroom
        ),
    )(x, w1, b1, w2, b2, w3, b3)
    return out[:B]


def init_params(key):
    # f32 master params mimicking torch.nn.Linear default init (uniform +-1/sqrt(fan_in)).
    # Weights stored as [in, out] (transposed vs torch's [out, in]).
    def linear(key, fan_in, fan_out):
        kw, kb = jax.random.split(key)
        bound = fan_in ** -0.5
        w = jax.random.uniform(kw, (fan_in, fan_out), jnp.float32, -bound, bound)
        b = jax.random.uniform(kb, (1, fan_out), jnp.float32, -bound, bound)
        return w, b

    k1, k2, k3 = jax.random.split(key, 3)
    w1, b1 = linear(k1, STATE_DIM, H1)
    w2, b2 = linear(k2, H1, H2)
    w3, b3 = linear(k3, H2, OUT)
    return (w1, b1, w2, b2, w3, b3)


def prepare_params(params_f32, fc1_dtype=None):
    # Kernel-dtype copies: w1/b1 in the fc1 elementwise dtype, w2/w3 in bf16 (MXU
    # operands), b2/b3 stay f32 (added onto the f32 accumulators).
    if fc1_dtype is None:
        fc1_dtype = _fc1_compute_dtype()
    w1, b1, w2, b2, w3, b3 = params_f32
    return (w1.astype(fc1_dtype), b1.astype(fc1_dtype),
            w2.astype(jnp.bfloat16), b2,
            w3.astype(jnp.bfloat16), b3)


def reference_forward_f32(x, params_f32):
    # Pure-f32 reference matching the original PyTorch PolicyNet semantics.
    w1, b1, w2, b2, w3, b3 = params_f32
    h1 = jnp.maximum(x @ w1 + b1, 0.0)
    h2 = jnp.maximum(h1 @ w2 + b2, 0.0)
    y = h2 @ w3 + b3
    m = OUT // 2
    return jnp.concatenate([y[:, :m], jnp.logaddexp(0.0, y[:, m:]) + 1e-5], axis=1)


if __name__ == "__main__":
    key = jax.random.PRNGKey(0)
    kp, kx = jax.random.split(key)
    params_f32 = init_params(kp)
    params = prepare_params(params_f32)

    B = 8
    x = jax.random.normal(kx, (B, STATE_DIM), jnp.float32)

    out = jax.block_until_ready(policy_net_forward(x, params))

    # Compare against the true f32 network (bf16 MXU/fc1 operands -> loose tolerance).
    ref = reference_forward_f32(x, params_f32)
    assert out.shape == (B, OUT)
    assert bool(jnp.all(out[:, ACTION_DIM:] > 0.0)), "softplus head must be positive"
    assert jnp.allclose(out, ref, atol=5e-2, rtol=5e-2), "mismatch vs f32 reference"
    print("KERNEL_OK")
</pallas_src>

<mosaic_0001>
module attributes {stable_mosaic.version = 11 : i64} {
  func.func @policy_net_kernel(%arg0: i32, %arg1: memref<8x3xf32, #tpu.memory_space<vmem>>, %arg2: memref<3x1024xbf16, #tpu.memory_space<vmem>>, %arg3: memref<1x1024xbf16, #tpu.memory_space<vmem>>, %arg4: memref<1024x512xbf16, #tpu.memory_space<vmem>>, %arg5: memref<1x512xf32, #tpu.memory_space<vmem>>, %arg6: memref<512x4xbf16, #tpu.memory_space<vmem>>, %arg7: memref<1x4xf32, #tpu.memory_space<vmem>>, %arg8: memref<8x4xf32, #tpu.memory_space<vmem>>) attributes {dimension_semantics = [#tpu.dimension_semantics<parallel>], iteration_bounds = array<i64: 1>, scalar_prefetch = 0 : i64, scratch_operands = 0 : i64, tpu.core_type = #tpu.core_type<tc>, window_params = [{transform_indices = @transform_0, window_bounds = array<i64: 8, 3>}, {pipeline_mode = #tpu.pipeline_mode<synchronous>, transform_indices = @transform_1, window_bounds = array<i64: 3, 1024>}, {pipeline_mode = #tpu.pipeline_mode<synchronous>, transform_indices = @transform_2, window_bounds = array<i64: 1, 1024>}, {pipeline_mode = #tpu.pipeline_mode<synchronous>, transform_indices = @transform_3, window_bounds = array<i64: 1024, 512>}, {pipeline_mode = #tpu.pipeline_mode<synchronous>, transform_indices = @transform_4, window_bounds = array<i64: 1, 512>}, {pipeline_mode = #tpu.pipeline_mode<synchronous>, transform_indices = @transform_5, window_bounds = array<i64: 512, 4>}, {pipeline_mode = #tpu.pipeline_mode<synchronous>, transform_indices = @transform_6, window_bounds = array<i64: 1, 4>}, {transform_indices = @transform_7, window_bounds = array<i64: 8, 4>}]} {
    %c0 = arith.constant 0 : index
    %c0_0 = arith.constant 0 : index
    %0 = vector.load %arg1[%c0, %c0_0] : memref<8x3xf32, #tpu.memory_space<vmem>>, vector<8x3xf32>
    %c0_1 = arith.constant 0 : index
    %c0_2 = arith.constant 0 : index
    %1 = vector.load %arg2[%c0_1, %c0_2] : memref<3x1024xbf16, #tpu.memory_space<vmem>>, vector<3x1024xbf16>
    %2 = vector.extract_strided_slice %0 {offsets = [0, 0], sizes = [8, 1], strides = [1, 1]} : vector<8x3xf32> to vector<8x1xf32>
    %3 = arith.truncf %2 : vector<8x1xf32> to vector<8x1xbf16>
    %4 = vector.extract_strided_slice %0 {offsets = [0, 1], sizes = [8, 1], strides = [1, 1]} : vector<8x3xf32> to vector<8x1xf32>
    %5 = arith.truncf %4 : vector<8x1xf32> to vector<8x1xbf16>
    %6 = vector.extract_strided_slice %0 {offsets = [0, 2], sizes = [8, 1], strides = [1, 1]} : vector<8x3xf32> to vector<8x1xf32>
    %7 = arith.truncf %6 : vector<8x1xf32> to vector<8x1xbf16>
    %c0_3 = arith.constant 0 : index
    %c0_4 = arith.constant 0 : index
    %8 = vector.load %arg3[%c0_3, %c0_4] : memref<1x1024xbf16, #tpu.memory_space<vmem>>, vector<1x1024xbf16>
    %9 = vector.extract_strided_slice %1 {offsets = [0, 0], sizes = [1, 1024], strides = [1, 1]} : vector<3x1024xbf16> to vector<1x1024xbf16>
    %10 = vector.broadcast %3 : vector<8x1xbf16> to vector<8x1024xbf16>
    %11 = vector.broadcast %9 : vector<1x1024xbf16> to vector<8x1024xbf16>
    %12 = arith.mulf %10, %11 : vector<8x1024xbf16>
    %13 = vector.broadcast %8 : vector<1x1024xbf16> to vector<8x1024xbf16>
    %14 = arith.addf %13, %12 : vector<8x1024xbf16>
    %15 = vector.extract_strided_slice %1 {offsets = [1, 0], sizes = [1, 1024], strides = [1, 1]} : vector<3x1024xbf16> to vector<1x1024xbf16>
    %16 = vector.broadcast %5 : vector<8x1xbf16> to vector<8x1024xbf16>
    %17 = vector.broadcast %15 : vector<1x1024xbf16> to vector<8x1024xbf16>
    %18 = arith.mulf %16, %17 : vector<8x1024xbf16>
    %19 = arith.addf %14, %18 : vector<8x1024xbf16>
    %20 = vector.extract_strided_slice %1 {offsets = [2, 0], sizes = [1, 1024], strides = [1, 1]} : vector<3x1024xbf16> to vector<1x1024xbf16>
    %21 = vector.broadcast %7 : vector<8x1xbf16> to vector<8x1024xbf16>
    %22 = vector.broadcast %20 : vector<1x1024xbf16> to vector<8x1024xbf16>
    %23 = arith.mulf %21, %22 : vector<8x1024xbf16>
    %24 = arith.addf %19, %23 : vector<8x1024xbf16>
    %cst = arith.constant 0.000000e+00 : bf16
    %25 = vector.broadcast %cst : bf16 to vector<8x1024xbf16>
    %26 = arith.maximumf %24, %25 : vector<8x1024xbf16>
    %c0_5 = arith.constant 0 : index
    %c0_6 = arith.constant 0 : index
    %27 = vector.load %arg4[%c0_5, %c0_6] : memref<1024x512xbf16, #tpu.memory_space<vmem>>, vector<1024x512xbf16>
    %cst_7 = arith.constant dense<0.000000e+00> : vector<8x512xf32>
    %28 = tpu.matmul %26, %27, %cst_7 {dimension_numbers = #tpu.dot_dimension_numbers<[1], [0], [0], [1], [0, 0, 1, 1], [], []>} : vector<8x1024xbf16>, vector<1024x512xbf16>, vector<8x512xf32> -> vector<8x512xf32>
    %c0_8 = arith.constant 0 : index
    %c0_9 = arith.constant 0 : index
    %29 = vector.load %arg5[%c0_8, %c0_9] : memref<1x512xf32, #tpu.memory_space<vmem>>, vector<1x512xf32>
    %30 = vector.broadcast %29 : vector<1x512xf32> to vector<8x512xf32>
    %31 = arith.addf %28, %30 : vector<8x512xf32>
    %cst_10 = arith.constant 0.000000e+00 : f32
    %32 = vector.broadcast %cst_10 : f32 to vector<8x512xf32>
    %33 = arith.maximumf %31, %32 : vector<8x512xf32>
    %34 = arith.truncf %33 : vector<8x512xf32> to vector<8x512xbf16>
    %c0_11 = arith.constant 0 : index
    %c0_12 = arith.constant 0 : index
    %35 = vector.load %arg6[%c0_11, %c0_12] : memref<512x4xbf16, #tpu.memory_space<vmem>>, vector<512x4xbf16>
    %cst_13 = arith.constant dense<0.000000e+00> : vector<8x4xf32>
    %36 = tpu.matmul %34, %35, %cst_13 {dimension_numbers = #tpu.dot_dimension_numbers<[1], [0], [0], [1], [0, 0, 1, 1], [], []>} : vector<8x512xbf16>, vector<512x4xbf16>, vector<8x4xf32> -> vector<8x4xf32>
    %c0_14 = arith.constant 0 : index
    %c0_15 = arith.constant 0 : index
    %37 = vector.load %arg7[%c0_14, %c0_15] : memref<1x4xf32, #tpu.memory_space<vmem>>, vector<1x4xf32>
    %38 = vector.broadcast %37 : vector<1x4xf32> to vector<8x4xf32>
    %39 = arith.addf %36, %38 : vector<8x4xf32>
    %40 = tpu.iota {dimensions = array<i32: 1>} : vector<8x4xi32>
    %cst_16 = arith.constant 0.000000e+00 : f32
    %41 = vector.broadcast %cst_16 : f32 to vector<8x4xf32>
    %42 = arith.maximumf %41, %39 : vector<8x4xf32>
    %43 = vector.broadcast %cst_16 : f32 to vector<8x4xf32>
    %44 = arith.subf %43, %39 : vector<8x4xf32>
    %45 = arith.cmpf one, %44, %44 : vector<8x4xf32>
    %46 = vector.broadcast %cst_16 : f32 to vector<8x4xf32>
    %47 = arith.addf %46, %39 : vector<8x4xf32>
    %48 = math.absf %44 : vector<8x4xf32>
    %cst_17 = arith.constant 0.000000e+00 : f32
    %49 = vector.broadcast %cst_17 : f32 to vector<8x4xf32>
    %50 = arith.subf %49, %48 : vector<8x4xf32>
    %51 = math.exp %50 : vector<8x4xf32>
    %52 = math.log1p %51 : vector<8x4xf32>
    %53 = arith.addf %42, %52 : vector<8x4xf32>
    %54 = arith.select %45, %47, %53 : vector<8x4xi1>, vector<8x4xf32>
    %c2_i32 = arith.constant 2 : i32
    %55 = vector.broadcast %c2_i32 : i32 to vector<8x4xi32>
    %56 = arith.cmpi slt, %40, %55 : vector<8x4xi32>
    %cst_18 = arith.constant 9.99999974E-6 : f32
    %57 = vector.broadcast %cst_18 : f32 to vector<8x4xf32>
    %58 = arith.addf %54, %57 : vector<8x4xf32>
    %59 = arith.select %56, %39, %58 : vector<8x4xi1>, vector<8x4xf32>
    %c0_19 = arith.constant 0 : index
    %c0_20 = arith.constant 0 : index
    %60 = vector.load %arg8[%c0_19, %c0_20] : memref<8x4xf32, #tpu.memory_space<vmem>>, vector<8x4xf32>
    tpu.vector_store %arg8[%c0_19, %c0_20], %59 {strides = array<i32>} : memref<8x4xf32, #tpu.memory_space<vmem>>, vector<8x4xf32>,
    return
  }
  func.func @transform_0(%arg0: i32) -> (i32, i32) {
    %c0_i32 = arith.constant 0 : i32
    %c0_i32_0 = arith.constant 0 : i32
    return %arg0, %c0_i32 : i32, i32
  }
  func.func @transform_1(%arg0: i32) -> (i32, i32) {
    %c0_i32 = arith.constant 0 : i32
    %c0_i32_0 = arith.constant 0 : i32
    %c0_i32_1 = arith.constant 0 : i32
    return %c0_i32, %c0_i32_0 : i32, i32
  }
  func.func @transform_2(%arg0: i32) -> (i32, i32) {
    %c0_i32 = arith.constant 0 : i32
    %c0_i32_0 = arith.constant 0 : i32
    %c0_i32_1 = arith.constant 0 : i32
    return %c0_i32, %c0_i32_0 : i32, i32
  }
  func.func @transform_3(%arg0: i32) -> (i32, i32) {
    %c0_i32 = arith.constant 0 : i32
    %c0_i32_0 = arith.constant 0 : i32
    %c0_i32_1 = arith.constant 0 : i32
    return %c0_i32, %c0_i32_0 : i32, i32
  }
  func.func @transform_4(%arg0: i32) -> (i32, i32) {
    %c0_i32 = arith.constant 0 : i32
    %c0_i32_0 = arith.constant 0 : i32
    %c0_i32_1 = arith.constant 0 : i32
    return %c0_i32, %c0_i32_0 : i32, i32
  }
  func.func @transform_5(%arg0: i32) -> (i32, i32) {
    %c0_i32 = arith.constant 0 : i32
    %c0_i32_0 = arith.constant 0 : i32
    %c0_i32_1 = arith.constant 0 : i32
    return %c0_i32, %c0_i32_0 : i32, i32
  }
  func.func @transform_6(%arg0: i32) -> (i32, i32) {
    %c0_i32 = arith.constant 0 : i32
    %c0_i32_0 = arith.constant 0 : i32
    %c0_i32_1 = arith.constant 0 : i32
    return %c0_i32, %c0_i32_0 : i32, i32
  }
  func.func @transform_7(%arg0: i32) -> (i32, i32) {
    %c0_i32 = arith.constant 0 : i32
    %c0_i32_0 = arith.constant 0 : i32
    return %arg0, %c0_i32 : i32, i32
  }
}

</mosaic_0001>

<llo_original>
// kernel: policy_net_forward.1
$region0: #{policy_net_forward.1}
  #allocation0 [shape = 'u32[]', space=smem, size = 0x4, offset = 0x4, fixed_abs, tag = 'smem constant byte address 0x4 - core index']
  #allocation1 [shape = 'u32[144,128]{1,0:T(1,128)}', space=vmem, size = 0x12000, scoped, tag = 'internal scratch']
  %s0 = inlined_call_operand.vmem [shape: f32[8,3], index: 0, kind: input, shape index: {}]
  %s1 = inlined_call_operand.vmem [shape: bf16[3,1024], index: 1, kind: input, shape index: {}]
  %s2 = inlined_call_operand.vmem [shape: bf16[1,1024], index: 2, kind: input, shape index: {}]
  %s3 = inlined_call_operand.hbm [shape: bf16[1024,512], index: 3, kind: input, shape index: {}]
  %s4 = inlined_call_operand.vmem [shape: f32[1,512], index: 4, kind: input, shape index: {}]
  %s5 = inlined_call_operand.vmem [shape: bf16[512,4], index: 5, kind: input, shape index: {}]
  %s6 = inlined_call_operand.vmem [shape: f32[1,4], index: 6, kind: input, shape index: {}]
  %s7 = inlined_call_operand.vmem [shape: f32[8,4], index: 7, kind: output, shape index: {}]
  %s8 = sld [smem:[#allocation0]]
  $region42: #{policy_net_forward.1} parent=0
    _
  %s10 = ssub.s32 1, %s8
  %s11 = scalar_select 0, %s10, %s8
  $region1: #{policy_net_forward.1} parent=0
    #allocation2 [shape = 'u8[1048576]{0}', space=vmem, size = 0x100000, scoped, tag = 'input window, operand 3, single buffered']
    #allocation3 [shape = 's32[1]{0}', space=sflag, size = 0x4, scoped, tag = 'scoped memory for policy_net_forward.1']
    %12 = vsyncpa [#allocation3], 0
    // Predicated region
    $region2: #{policy_net_forward.1} parent=1 // pred_check
      _
    $region3: #{policy_net_forward.1} parent=1 // pred_check_branch
      %14 = sbr.rel (0) target = $region5
    $region4: #{policy_net_forward.1} parent=1 // pred_region
      _
    $region5: #{policy_net_forward.1} parent=1 // pred_fallthru
      _
    // Predicated region
    $region6: #{policy_net_forward.1} parent=1 // pred_check
      _
    $region7: #{policy_net_forward.1} parent=1 // pred_check_branch
      %16 = sbr.rel (0) target = $region9
    $region8: #{policy_net_forward.1} parent=1 // pred_region
      _
    $region9: #{policy_net_forward.1} parent=1 // pred_fallthru
      _
    // Predicated region
    $region10: #{policy_net_forward.1} parent=1 // pred_check
      _
    $region11: #{policy_net_forward.1} parent=1 // pred_check_branch
      %18 = sbr.rel (0) target = $region13
    $region12: #{policy_net_forward.1} parent=1 // pred_region
      _
    $region13: #{policy_net_forward.1} parent=1 // pred_fallthru
      _
    // Predicated region
    $region14: #{policy_net_forward.1} parent=1 // pred_check
      _
    $region15: #{policy_net_forward.1} parent=1 // pred_check_branch
      %20 = sbr.rel (0) target = $region17
    $region16: #{policy_net_forward.1} parent=1 // pred_region
      %s22 = ssub.s32 32768, 32768
      %23 = vsyncadd [#allocation3], %s22
      %s24 = sshll.u32 [#allocation2], 4
      %s25 = int_to_ptr.vmem [resolvable:$true] %s24
      %30 = dma.hbm_to_vmem [thread:$0]  %s3, 32768, %s25, [#allocation3], 256, 256, 16
    $region17: #{policy_net_forward.1} parent=1 // pred_fallthru
      _
    // Predicated region
    $region18: #{policy_net_forward.1} parent=1 // pred_check
      _
    $region19: #{policy_net_forward.1} parent=1 // pred_check_branch
      %32 = sbr.rel (0) target = $region21
    $region20: #{policy_net_forward.1} parent=1 // pred_region
      _
    $region21: #{policy_net_forward.1} parent=1 // pred_fallthru
      _
    // Predicated region
    $region22: #{policy_net_forward.1} parent=1 // pred_check
      _
    $region23: #{policy_net_forward.1} parent=1 // pred_check_branch
      %34 = sbr.rel (0) target = $region25
    $region24: #{policy_net_forward.1} parent=1 // pred_region
      _
    $region25: #{policy_net_forward.1} parent=1 // pred_fallthru
      _
    // Predicated region
    $region26: #{policy_net_forward.1} parent=1 // pred_check
      _
    $region27: #{policy_net_forward.1} parent=1 // pred_check_branch
      %36 = sbr.rel (0) target = $region29
    $region28: #{policy_net_forward.1} parent=1 // pred_region
      _
    $region29: #{policy_net_forward.1} parent=1 // pred_fallthru
      _
    // Predicated region
    $region30: #{policy_net_forward.1} parent=1 // pred_check
      _
    $region31: #{policy_net_forward.1} parent=1 // pred_check_branch
      %38 = sbr.rel (0) target = $region33
    $region32: #{policy_net_forward.1} parent=1 // pred_region
      %39 = dma.done [#allocation3], 32768
    $region33: #{policy_net_forward.1} parent=1 // pred_fallthru
      _
    %v41 = vld [vmem:[%s0] sm:$0xff]
    %v42 = vld [vmem:[%s1] sm:$0xff]
    %v43 = vld [vmem:[%s1 + $0x8] sm:$0xff]
    %v44 = vpack.c.bf16 %v41, %v41
    %v45 = vld [vmem:[%s2] sm:$0xff]
    %47 = vset.pattern.permute.xlu0 0
    %48 = vperm.xlu0 %47, %v44
    %v49 = vpop.permute.xlu0 %48
    %v53 = vcombine.high %v42, %v42
    %v55 = vunpack.c.l.s4 1983009808
    %v56 = vunpack.c.0.s8 %v55
    %v57 = vlaneseq
    %v58 = vshrl.u32 %v57, 7
    %v59 = vsub.s32 %v56, %v58
    %v60 = vrot.slane %v42, %v59
    %v62 = vunpack.c.l.s4 1983009808
    %v63 = vunpack.c.0.s8 %v62
    %v64 = vlaneseq
    %v65 = vshrl.u32 %v64, 7
    %v66 = vsub.s32 %v63, %v65
    %v67 = vrot.slane %v53, %v66
    %v68 = vcombine.high %v60, %v60
    %v69 = vcombine.high %v67, %v67
    %v70 = vcombine.high %v43, %v43
    %v72 = vunpack.c.l.s4 1983009808
    %v73 = vunpack.c.0.s8 %v72
    %v74 = vlaneseq
    %v75 = vshrl.u32 %v74, 7
    %v76 = vsub.s32 %v73, %v75
    %v77 = vrot.slane %v43, %v76
    %v79 = vunpack.c.l.s4 1983009808
    %v80 = vunpack.c.0.s8 %v79
    %v81 = vlaneseq
    %v82 = vshrl.u32 %v81, 7
    %v83 = vsub.s32 %v80, %v82
    %v84 = vrot.slane %v70, %v83
    %v85 = vcombine.high %v77, %v77
    %v86 = vcombine.high %v84, %v84
    %v88 = vpack.i.b16 %v60, %v60
    %v90 = vlaneseq
    %v91 = vshrl.u32 %v90, 7
    %v92 = vsub.s32 0, %v91
    %v93 = vrot.slane %v88, %v92
    %v95 = vpack.i.b16 %v68, %v68
    %v97 = vlaneseq
    %v98 = vshrl.u32 %v97, 7
    %v99 = vsub.s32 0, %v98
    %v100 = vrot.slane %v95, %v99
    %v102 = vpack.i.b16 %v67, %v67
    %v104 = vlaneseq
    %v105 = vshrl.u32 %v104, 7
    %v106 = vsub.s32 0, %v105
    %v107 = vrot.slane %v102, %v106
    %v109 = vpack.i.b16 %v69, %v69
    %v111 = vlaneseq
    %v112 = vshrl.u32 %v111, 7
    %v113 = vsub.s32 0, %v112
    %v114 = vrot.slane %v109, %v113
    %v116 = vpack.i.b16 %v77, %v77
    %v118 = vlaneseq
    %v119 = vshrl.u32 %v118, 7
    %v120 = vsub.s32 0, %v119
    %v121 = vrot.slane %v116, %v120
    %v123 = vpack.i.b16 %v85, %v85
    %v125 = vlaneseq
    %v126 = vshrl.u32 %v125, 7
    %v127 = vsub.s32 0, %v126
    %v128 = vrot.slane %v123, %v127
    %v130 = vpack.i.b16 %v84, %v84
    %v132 = vlaneseq
    %v133 = vshrl.u32 %v132, 7
    %v134 = vsub.s32 0, %v133
    %v135 = vrot.slane %v130, %v134
    %v137 = vpack.i.b16 %v86, %v86
    %v139 = vlaneseq
    %v140 = vshrl.u32 %v139, 7
    %v141 = vsub.s32 0, %v140
    %v142 = vrot.slane %v137, %v141
    %v143 = vmul.bf16 %v49, %v93
    %v144 = vmul.bf16 %v49, %v100
    %v145 = vmul.bf16 %v49, %v107
    %v146 = vmul.bf16 %v49, %v114
    %v147 = vmul.bf16 %v49, %v121
    %v148 = vmul.bf16 %v49, %v128
    %v149 = vmul.bf16 %v49, %v135
    %v150 = vmul.bf16 %v49, %v142
    %v152 = vcombine.high %v45, %v45
    %v154 = vunpack.c.l.s4 1966171168
    %v155 = vunpack.c.0.s8 %v154
    %v156 = vlaneseq
    %v157 = vshrl.u32 %v156, 7
    %v158 = vsub.s32 %v155, %v157
    %v159 = vrot.slane %v45, %v158
    %v161 = vunpack.c.l.s4 1966171168
    %v162 = vunpack.c.0.s8 %v161
    %v163 = vlaneseq
    %v164 = vshrl.u32 %v163, 7
    %v165 = vsub.s32 %v162, %v164
    %v166 = vrot.slane %v152, %v165
    %v167 = vcombine.high %v159, %v159
    %v168 = vcombine.high %v166, %v166
    %v170 = vunpack.c.l.s4 1966171168
    %v171 = vunpack.c.0.s8 %v170
    %v172 = vlaneseq
    %v173 = vshrl.u32 %v172, 7
    %v174 = vsub.s32 %v171, %v173
    %v175 = vrot.slane %v159, %v174
    %v177 = vunpack.c.l.s4 1966171168
    %v178 = vunpack.c.0.s8 %v177
    %v179 = vlaneseq
    %v180 = vshrl.u32 %v179, 7
    %v181 = vsub.s32 %v178, %v180
    %v182 = vrot.slane %v166, %v181
    %v184 = vunpack.c.l.s4 1966171168
    %v185 = vunpack.c.0.s8 %v184
    %v186 = vlaneseq
    %v187 = vshrl.u32 %v186, 7
    %v188 = vsub.s32 %v185, %v187
    %v189 = vrot.slane %v167, %v188
    %v191 = vunpack.c.l.s4 1966171168
    %v192 = vunpack.c.0.s8 %v191
    %v193 = vlaneseq
    %v194 = vshrl.u32 %v193, 7
    %v195 = vsub.s32 %v192, %v194
    %v196 = vrot.slane %v168, %v195
    %v197 = vcombine.high %v175, %v175
    %v198 = vcombine.high %v182, %v182
    %v199 = vcombine.high %v189, %v189
    %v200 = vcombine.high %v196, %v196
    %v202 = vpack.i.b16 %v175, %v175
    %v204 = vlaneseq
    %v205 = vshrl.u32 %v204, 7
    %v206 = vsub.s32 0, %v205
    %v207 = vrot.slane %v202, %v206
    %v209 = vpack.i.b16 %v189, %v189
    %v211 = vlaneseq
    %v212 = vshrl.u32 %v211, 7
    %v213 = vsub.s32 0, %v212
    %v214 = vrot.slane %v209, %v213
    %v216 = vpack.i.b16 %v197, %v197
    %v218 = vlaneseq
    %v219 = vshrl.u32 %v218, 7
    %v220 = vsub.s32 0, %v219
    %v221 = vrot.slane %v216, %v220
    %v223 = vpack.i.b16 %v199, %v199
    %v225 = vlaneseq
    %v226 = vshrl.u32 %v225, 7
    %v227 = vsub.s32 0, %v226
    %v228 = vrot.slane %v223, %v227
    %v230 = vpack.i.b16 %v182, %v182
    %v232 = vlaneseq
    %v233 = vshrl.u32 %v232, 7
    %v234 = vsub.s32 0, %v233
    %v235 = vrot.slane %v230, %v234
    %v237 = vpack.i.b16 %v196, %v196
    %v239 = vlaneseq
    %v240 = vshrl.u32 %v239, 7
    %v241 = vsub.s32 0, %v240
    %v242 = vrot.slane %v237, %v241
    %v244 = vpack.i.b16 %v198, %v198
    %v246 = vlaneseq
    %v247 = vshrl.u32 %v246, 7
    %v248 = vsub.s32 0, %v247
    %v249 = vrot.slane %v244, %v248
    %v251 = vpack.i.b16 %v200, %v200
    %v253 = vlaneseq
    %v254 = vshrl.u32 %v253, 7
    %v255 = vsub.s32 0, %v254
    %v256 = vrot.slane %v251, %v255
    %v257 = vadd.bf16 %v207, %v143
    %v258 = vadd.bf16 %v214, %v144
    %v259 = vadd.bf16 %v221, %v145
    %v260 = vadd.bf16 %v228, %v146
    %v261 = vadd.bf16 %v235, %v147
    %v262 = vadd.bf16 %v242, %v148
    %v263 = vadd.bf16 %v249, %v149
    %v264 = vadd.bf16 %v256, %v150
    %265 = vset.pattern.permute.xlu0 1
    %266 = vperm.xlu0 %265, %v44
    %v267 = vpop.permute.xlu0 %266
    %v269 = vshrl.u32 %v60, 16
    %v270 = vpack.i.b16 %v269, %v269
    %v272 = vlaneseq
    %v273 = vshrl.u32 %v272, 7
    %v274 = vsub.s32 0, %v273
    %v275 = vrot.slane %v270, %v274
    %v276 = vshrl.u32 %v68, 16
    %v277 = vpack.i.b16 %v276, %v276
    %v279 = vlaneseq
    %v280 = vshrl.u32 %v279, 7
    %v281 = vsub.s32 0, %v280
    %v282 = vrot.slane %v277, %v281
    %v283 = vshrl.u32 %v67, 16
    %v284 = vpack.i.b16 %v283, %v283
    %v286 = vlaneseq
    %v287 = vshrl.u32 %v286, 7
    %v288 = vsub.s32 0, %v287
    %v289 = vrot.slane %v284, %v288
    %v290 = vshrl.u32 %v69, 16
    %v291 = vpack.i.b16 %v290, %v290
    %v293 = vlaneseq
    %v294 = vshrl.u32 %v293, 7
    %v295 = vsub.s32 0, %v294
    %v296 = vrot.slane %v291, %v295
    %v297 = vshrl.u32 %v77, 16
    %v298 = vpack.i.b16 %v297, %v297
    %v300 = vlaneseq
    %v301 = vshrl.u32 %v300, 7
    %v302 = vsub.s32 0, %v301
    %v303 = vrot.slane %v298, %v302
    %v304 = vshrl.u32 %v85, 16
    %v305 = vpack.i.b16 %v304, %v304
    %v307 = vlaneseq
    %v308 = vshrl.u32 %v307, 7
    %v309 = vsub.s32 0, %v308
    %v310 = vrot.slane %v305, %v309
    %v311 = vshrl.u32 %v84, 16
    %v312 = vpack.i.b16 %v311, %v311
    %v314 = vlaneseq
    %v315 = vshrl.u32 %v314, 7
    %v316 = vsub.s32 0, %v315
    %v317 = vrot.slane %v312, %v316
    %v318 = vshrl.u32 %v86, 16
    %v319 = vpack.i.b16 %v318, %v318
    %v321 = vlaneseq
    %v322 = vshrl.u32 %v321, 7
    %v323 = vsub.s32 0, %v322
    %v324 = vrot.slane %v319, %v323
    %v325 = vmul.bf16 %v267, %v275
    %v326 = vmul.bf16 %v267, %v282
    %v327 = vmul.bf16 %v267, %v289
    %v328 = vmul.bf16 %v267, %v296
    %v329 = vmul.bf16 %v267, %v303
    %v330 = vmul.bf16 %v267, %v310
    %v331 = vmul.bf16 %v267, %v317
    %v332 = vmul.bf16 %v267, %v324
    %v333 = vadd.bf16 %v257, %v325
    %v334 = vadd.bf16 %v258, %v326
    %v335 = vadd.bf16 %v259, %v327
    %v336 = vadd.bf16 %v260, %v328
    %v337 = vadd.bf16 %v261, %v329
    %v338 = vadd.bf16 %v262, %v330
    %v339 = vadd.bf16 %v263, %v331
    %v340 = vadd.bf16 %v264, %v332
    %341 = vset.pattern.permute.xlu0 2
    %342 = vperm.xlu0 %341, %v44
    %v343 = vpop.permute.xlu0 %342
    %v345 = vlaneseq
    %v346 = vshrl.u32 %v345, 7
    %v347 = vsub.s32 1, %v346
    %v348 = vrot.slane %v88, %v347
    %v349 = vlaneseq
    %v350 = vshrl.u32 %v349, 7
    %v351 = vsub.s32 1, %v350
    %v352 = vrot.slane %v95, %v351
    %v353 = vlaneseq
    %v354 = vshrl.u32 %v353, 7
    %v355 = vsub.s32 1, %v354
    %v356 = vrot.slane %v102, %v355
    %v357 = vlaneseq
    %v358 = vshrl.u32 %v357, 7
    %v359 = vsub.s32 1, %v358
    %v360 = vrot.slane %v109, %v359
    %v361 = vlaneseq
    %v362 = vshrl.u32 %v361, 7
    %v363 = vsub.s32 1, %v362
    %v364 = vrot.slane %v116, %v363
    %v365 = vlaneseq
    %v366 = vshrl.u32 %v365, 7
    %v367 = vsub.s32 1, %v366
    %v368 = vrot.slane %v123, %v367
    %v369 = vlaneseq
    %v370 = vshrl.u32 %v369, 7
    %v371 = vsub.s32 1, %v370
    %v372 = vrot.slane %v130, %v371
    %v373 = vlaneseq
    %v374 = vshrl.u32 %v373, 7
    %v375 = vsub.s32 1, %v374
    %v376 = vrot.slane %v137, %v375
    %v377 = vmul.bf16 %v343, %v348
    %v378 = vmul.bf16 %v343, %v352
    %v379 = vmul.bf16 %v343, %v356
    %v380 = vmul.bf16 %v343, %v360
    %v381 = vmul.bf16 %v343, %v364
    %v382 = vmul.bf16 %v343, %v368
    %v383 = vmul.bf16 %v343, %v372
    %v384 = vmul.bf16 %v343, %v376
    %v385 = vadd.bf16 %v333, %v377
    %v386 = vadd.bf16 %v334, %v378
    %v387 = vadd.bf16 %v335, %v379
    %v388 = vadd.bf16 %v336, %v380
    %v389 = vadd.bf16 %v337, %v381
    %v390 = vadd.bf16 %v338, %v382
    %v391 = vadd.bf16 %v339, %v383
    %v392 = vadd.bf16 %v340, %v384
    %v393 = vmax.bf16 %v385, 0
    %v394 = vmax.bf16 %v386, 0
    %v395 = vmax.bf16 %v387, 0
    %v396 = vmax.bf16 %v388, 0
    %v397 = vmax.bf16 %v389, 0
    %v398 = vmax.bf16 %v390, 0
    %v399 = vmax.bf16 %v391, 0
    %v400 = vmax.bf16 %v392, 0
    %v401 = vld [vmem:[#allocation2] sm:$0xff]
    %v402 = vld [vmem:[#allocation2 + $0x8] sm:$0xff]
    %v403 = vld [vmem:[#allocation2 + $0x10] sm:$0xff]
    %v404 = vld [vmem:[#allocation2 + $0x18] sm:$0xff]
    %v405 = vld [vmem:[#allocation2 + $0x20] sm:$0xff]
    %v406 = vld [vmem:[#allocation2 + $0x28] sm:$0xff]
    %v407 = vld [vmem:[#allocation2 + $0x30] sm:$0xff]
    %v408 = vld [vmem:[#allocation2 + $0x38] sm:$0xff]
    %v409 = vld [vmem:[#allocation2 + $0x40] sm:$0xff]
    %v410 = vld [vmem:[#allocation2 + $0x48] sm:$0xff]
    %v411 = vld [vmem:[#allocation2 + $0x50] sm:$0xff]
    %v412 = vld [vmem:[#allocation2 + $0x58] sm:$0xff]
    %v413 = vld [vmem:[#allocation2 + $0x60] sm:$0xff]
    %v414 = vld [vmem:[#allocation2 + $0x68] sm:$0xff]
    %v415 = vld [vmem:[#allocation2 + $0x70] sm:$0xff]
    %v416 = vld [vmem:[#allocation2 + $0x78] sm:$0xff]
    %v417 = vld [vmem:[#allocation2 + $0x80] sm:$0xff]
    %v418 = vld [vmem:[#allocation2 + $0x88] sm:$0xff]
    %v419 = vld [vmem:[#allocation2 + $0x90] sm:$0xff]
    %v420 = vld [vmem:[#allocation2 + $0x98] sm:$0xff]
    %v421 = vld [vmem:[#allocation2 + $0xa0] sm:$0xff]
    %v422 = vld [vmem:[#allocation2 + $0xa8] sm:$0xff]
    %v423 = vld [vmem:[#allocation2 + $0xb0] sm:$0xff]
    %v424 = vld [vmem:[#allocation2 + $0xb8] sm:$0xff]
    %v425 = vld [vmem:[#allocation2 + $0xc0] sm:$0xff]
    %v426 = vld [vmem:[#allocation2 + $0xc8] sm:$0xff]
    %v427 = vld [vmem:[#allocation2 + $0xd0] sm:$0xff]
    %v428 = vld [vmem:[#allocation2 + $0xd8] sm:$0xff]
    %v429 = vld [vmem:[#allocation2 + $0xe0] sm:$0xff]
    %v430 = vld [vmem:[#allocation2 + $0xe8] sm:$0xff]
    %v431 = vld [vmem:[#allocation2 + $0xf0] sm:$0xff]
    %v432 = vld [vmem:[#allocation2 + $0xf8] sm:$0xff]
    %v433 = vld [vmem:[#allocation2 + $0x100] sm:$0xff]
    %v434 = vld [vmem:[#allocation2 + $0x108] sm:$0xff]
    %v435 = vld [vmem:[#allocation2 + $0x110] sm:$0xff]
    %v436 = vld [vmem:[#allocation2 + $0x118] sm:$0xff]
    %v437 = vld [vmem:[#allocation2 + $0x120] sm:$0xff]
    %v438 = vld [vmem:[#allocation2 + $0x128] sm:$0xff]
    %v439 = vld [vmem:[#allocation2 + $0x130] sm:$0xff]
    %v440 = vld [vmem:[#allocation2 + $0x138] sm:$0xff]
    %v441 = vld [vmem:[#allocation2 + $0x140] sm:$0xff]
    %v442 = vld [vmem:[#allocation2 + $0x148] sm:$0xff]
    %v443 = vld [vmem:[#allocation2 + $0x150] sm:$0xff]
    %v444 = vld [vmem:[#allocation2 + $0x158] sm:$0xff]
    %v445 = vld [vmem:[#allocation2 + $0x160] sm:$0xff]
    %v446 = vld [vmem:[#allocation2 + $0x168] sm:$0xff]
    %v447 = vld [vmem:[#allocation2 + $0x170] sm:$0xff]
    %v448 = vld [vmem:[#allocation2 + $0x178] sm:$0xff]
    %v449 = vld [vmem:[#allocation2 + $0x180] sm:$0xff]
    %v450 = vld [vmem:[#allocation2 + $0x188] sm:$0xff]
    %v451 = vld [vmem:[#allocation2 + $0x190] sm:$0xff]
    %v452 = vld [vmem:[#allocation2 + $0x198] sm:$0xff]
    %v453 = vld [vmem:[#allocation2 + $0x1a0] sm:$0xff]
    %v454 = vld [vmem:[#allocation2 + $0x1a8] sm:$0xff]
    %v455 = vld [vmem:[#allocation2 + $0x1b0] sm:$0xff]
    %v456 = vld [vmem:[#allocation2 + $0x1b8] sm:$0xff]
    %v457 = vld [vmem:[#allocation2 + $0x1c0] sm:$0xff]
    %v458 = vld [vmem:[#allocation2 + $0x1c8] sm:$0xff]
    %v459 = vld [vmem:[#allocation2 + $0x1d0] sm:$0xff]
    %v460 = vld [vmem:[#allocation2 + $0x1d8] sm:$0xff]
    %v461 = vld [vmem:[#allocation2 + $0x1e0] sm:$0xff]
    %v462 = vld [vmem:[#allocation2 + $0x1e8] sm:$0xff]
    %v463 = vld [vmem:[#allocation2 + $0x1f0] sm:$0xff]
    %v464 = vld [vmem:[#allocation2 + $0x1f8] sm:$0xff]
    %v465 = vld [vmem:[#allocation2 + $0x200] sm:$0xff]
    %v466 = vld [vmem:[#allocation2 + $0x208] sm:$0xff]
    %v467 = vld [vmem:[#allocation2 + $0x210] sm:$0xff]
    %v468 = vld [vmem:[#allocation2 + $0x218] sm:$0xff]
    %v469 = vld [vmem:[#allocation2 + $0x220] sm:$0xff]
    %v470 = vld [vmem:[#allocation2 + $0x228] sm:$0xff]
    %v471 = vld [vmem:[#allocation2 + $0x230] sm:$0xff]
    %v472 = vld [vmem:[#allocation2 + $0x238] sm:$0xff]
    %v473 = vld [vmem:[#allocation2 + $0x240] sm:$0xff]
    %v474 = vld [vmem:[#allocation2 + $0x248] sm:$0xff]
    %v475 = vld [vmem:[#allocation2 + $0x250] sm:$0xff]
    %v476 = vld [vmem:[#allocation2 + $0x258] sm:$0xff]
    %v477 = vld [vmem:[#allocation2 + $0x260] sm:$0xff]
    %v478 = vld [vmem:[#allocation2 + $0x268] sm:$0xff]
    %v479 = vld [vmem:[#allocation2 + $0x270] sm:$0xff]
    %v480 = vld [vmem:[#allocation2 + $0x278] sm:$0xff]
    %v481 = vld [vmem:[#allocation2 + $0x280] sm:$0xff]
    %v482 = vld [vmem:[#allocation2 + $0x288] sm:$0xff]
    %v483 = vld [vmem:[#allocation2 + $0x290] sm:$0xff]
    %v484 = vld [vmem:[#allocation2 + $0x298] sm:$0xff]
    %v485 = vld [vmem:[#allocation2 + $0x2a0] sm:$0xff]
    %v486 = vld [vmem:[#allocation2 + $0x2a8] sm:$0xff]
    %v487 = vld [vmem:[#allocation2 + $0x2b0] sm:$0xff]
    %v488 = vld [vmem:[#allocation2 + $0x2b8] sm:$0xff]
    %v489 = vld [vmem:[#allocation2 + $0x2c0] sm:$0xff]
    %v490 = vld [vmem:[#allocation2 + $0x2c8] sm:$0xff]
    %v491 = vld [vmem:[#allocation2 + $0x2d0] sm:$0xff]
    %v492 = vld [vmem:[#allocation2 + $0x2d8] sm:$0xff]
    %v493 = vld [vmem:[#allocation2 + $0x2e0] sm:$0xff]
    %v494 = vld [vmem:[#allocation2 + $0x2e8] sm:$0xff]
    %v495 = vld [vmem:[#allocation2 + $0x2f0] sm:$0xff]
    %v496 = vld [vmem:[#allocation2 + $0x2f8] sm:$0xff]
    %v497 = vld [vmem:[#allocation2 + $0x300] sm:$0xff]
    %v498 = vld [vmem:[#allocation2 + $0x308] sm:$0xff]
    %v499 = vld [vmem:[#allocation2 + $0x310] sm:$0xff]
    %v500 = vld [vmem:[#allocation2 + $0x318] sm:$0xff]
    %v501 = vld [vmem:[#allocation2 + $0x320] sm:$0xff]
    %v502 = vld [vmem:[#allocation2 + $0x328] sm:$0xff]
    %v503 = vld [vmem:[#allocation2 + $0x330] sm:$0xff]
    %v504 = vld [vmem:[#allocation2 + $0x338] sm:$0xff]
    %v505 = vld [vmem:[#allocation2 + $0x340] sm:$0xff]
    %v506 = vld [vmem:[#allocation2 + $0x348] sm:$0xff]
    %v507 = vld [vmem:[#allocation2 + $0x350] sm:$0xff]
    %v508 = vld [vmem:[#allocation2 + $0x358] sm:$0xff]
    %v509 = vld [vmem:[#allocation2 + $0x360] sm:$0xff]
    %v510 = vld [vmem:[#allocation2 + $0x368] sm:$0xff]
    %v511 = vld [vmem:[#allocation2 + $0x370] sm:$0xff]
    %v512 = vld [vmem:[#allocation2 + $0x378] sm:$0xff]
    %v513 = vld [vmem:[#allocation2 + $0x380] sm:$0xff]
    %v514 = vld [vmem:[#allocation2 + $0x388] sm:$0xff]
    %v515 = vld [vmem:[#allocation2 + $0x390] sm:$0xff]
    %v516 = vld [vmem:[#allocation2 + $0x398] sm:$0xff]
    %v517 = vld [vmem:[#allocation2 + $0x3a0] sm:$0xff]
    %v518 = vld [vmem:[#allocation2 + $0x3a8] sm:$0xff]
    %v519 = vld [vmem:[#allocation2 + $0x3b0] sm:$0xff]
    %v520 = vld [vmem:[#allocation2 + $0x3b8] sm:$0xff]
    %v521 = vld [vmem:[#allocation2 + $0x3c0] sm:$0xff]
    %v522 = vld [vmem:[#allocation2 + $0x3c8] sm:$0xff]
    %v523 = vld [vmem:[#allocation2 + $0x3d0] sm:$0xff]
    %v524 = vld [vmem:[#allocation2 + $0x3d8] sm:$0xff]
    %v525 = vld [vmem:[#allocation2 + $0x3e0] sm:$0xff]
    %v526 = vld [vmem:[#allocation2 + $0x3e8] sm:$0xff]
    %v527 = vld [vmem:[#allocation2 + $0x3f0] sm:$0xff]
    %v528 = vld [vmem:[#allocation2 + $0x3f8] sm:$0xff]
    %v529 = vld [vmem:[#allocation2 + $0x400] sm:$0xff]
    %v530 = vld [vmem:[#allocation2 + $0x408] sm:$0xff]
    %v531 = vld [vmem:[#allocation2 + $0x410] sm:$0xff]
    %v532 = vld [vmem:[#allocation2 + $0x418] sm:$0xff]
    %v533 = vld [vmem:[#allocation2 + $0x420] sm:$0xff]
    %v534 = vld [vmem:[#allocation2 + $0x428] sm:$0xff]
    %v535 = vld [vmem:[#allocation2 + $0x430] sm:$0xff]
    %v536 = vld [vmem:[#allocation2 + $0x438] sm:$0xff]
    %v537 = vld [vmem:[#allocation2 + $0x440] sm:$0xff]
    %v538 = vld [vmem:[#allocation2 + $0x448] sm:$0xff]
    %v539 = vld [vmem:[#allocation2 + $0x450] sm:$0xff]
    %v540 = vld [vmem:[#allocation2 + $0x458] sm:$0xff]
    %v541 = vld [vmem:[#allocation2 + $0x460] sm:$0xff]
    %v542 = vld [vmem:[#allocation2 + $0x468] sm:$0xff]
    %v543 = vld [vmem:[#allocation2 + $0x470] sm:$0xff]
    %v544 = vld [vmem:[#allocation2 + $0x478] sm:$0xff]
    %v545 = vld [vmem:[#allocation2 + $0x480] sm:$0xff]
    %v546 = vld [vmem:[#allocation2 + $0x488] sm:$0xff]
    %v547 = vld [vmem:[#allocation2 + $0x490] sm:$0xff]
    %v548 = vld [vmem:[#allocation2 + $0x498] sm:$0xff]
    %v549 = vld [vmem:[#allocation2 + $0x4a0] sm:$0xff]
    %v550 = vld [vmem:[#allocation2 + $0x4a8] sm:$0xff]
    %v551 = vld [vmem:[#allocation2 + $0x4b0] sm:$0xff]
    %v552 = vld [vmem:[#allocation2 + $0x4b8] sm:$0xff]
    %v553 = vld [vmem:[#allocation2 + $0x4c0] sm:$0xff]
    %v554 = vld [vmem:[#allocation2 + $0x4c8] sm:$0xff]
    %v555 = vld [vmem:[#allocation2 + $0x4d0] sm:$0xff]
    %v556 = vld [vmem:[#allocation2 + $0x4d8] sm:$0xff]
    %v557 = vld [vmem:[#allocation2 + $0x4e0] sm:$0xff]
    %v558 = vld [vmem:[#allocation2 + $0x4e8] sm:$0xff]
    %v559 = vld [vmem:[#allocation2 + $0x4f0] sm:$0xff]
    %v560 = vld [vmem:[#allocation2 + $0x4f8] sm:$0xff]
    %v561 = vld [vmem:[#allocation2 + $0x500] sm:$0xff]
    %v562 = vld [vmem:[#allocation2 + $0x508] sm:$0xff]
    %v563 = vld [vmem:[#allocation2 + $0x510] sm:$0xff]
    %v564 = vld [vmem:[#allocation2 + $0x518] sm:$0xff]
    %v565 = vld [vmem:[#allocation2 + $0x520] sm:$0xff]
    %v566 = vld [vmem:[#allocation2 + $0x528] sm:$0xff]
    %v567 = vld [vmem:[#allocation2 + $0x530] sm:$0xff]
    %v568 = vld [vmem:[#allocation2 + $0x538] sm:$0xff]
    %v569 = vld [vmem:[#allocation2 + $0x540] sm:$0xff]
    %v570 = vld [vmem:[#allocation2 + $0x548] sm:$0xff]
    %v571 = vld [vmem:[#allocation2 + $0x550] sm:$0xff]
    %v572 = vld [vmem:[#allocation2 + $0x558] sm:$0xff]
    %v573 = vld [vmem:[#allocation2 + $0x560] sm:$0xff]
    %v574 = vld [vmem:[#allocation2 + $0x568] sm:$0xff]
    %v575 = vld [vmem:[#allocation2 + $0x570] sm:$0xff]
    %v576 = vld [vmem:[#allocation2 + $0x578] sm:$0xff]
    %v577 = vld [vmem:[#allocation2 + $0x580] sm:$0xff]
    %v578 = vld [vmem:[#allocation2 + $0x588] sm:$0xff]
    %v579 = vld [vmem:[#allocation2 + $0x590] sm:$0xff]
    %v580 = vld [vmem:[#allocation2 + $0x598] sm:$0xff]
    %v581 = vld [vmem:[#allocation2 + $0x5a0] sm:$0xff]
    %v582 = vld [vmem:[#allocation2 + $0x5a8] sm:$0xff]
    %v583 = vld [vmem:[#allocation2 + $0x5b0] sm:$0xff]
    %v584 = vld [vmem:[#allocation2 + $0x5b8] sm:$0xff]
    %v585 = vld [vmem:[#allocation2 + $0x5c0] sm:$0xff]
    %v586 = vld [vmem:[#allocation2 + $0x5c8] sm:$0xff]
    %v587 = vld [vmem:[#allocation2 + $0x5d0] sm:$0xff]
    %v588 = vld [vmem:[#allocation2 + $0x5d8] sm:$0xff]
    %v589 = vld [vmem:[#allocation2 + $0x5e0] sm:$0xff]
    %v590 = vld [vmem:[#allocation2 + $0x5e8] sm:$0xff]
    %v591 = vld [vmem:[#allocation2 + $0x5f0] sm:$0xff]
    %v592 = vld [vmem:[#allocation2 + $0x5f8] sm:$0xff]
    %v593 = vld [vmem:[#allocation2 + $0x600] sm:$0xff]
    %v594 = vld [vmem:[#allocation2 + $0x608] sm:$0xff]
    %v595 = vld [vmem:[#allocation2 + $0x610] sm:$0xff]
    %v596 = vld [vmem:[#allocation2 + $0x618] sm:$0xff]
    %v597 = vld [vmem:[#allocation2 + $0x620] sm:$0xff]
    %v598 = vld [vmem:[#allocation2 + $0x628] sm:$0xff]
    %v599 = vld [vmem:[#allocation2 + $0x630] sm:$0xff]
    %v600 = vld [vmem:[#allocation2 + $0x638] sm:$0xff]
    %v601 = vld [vmem:[#allocation2 + $0x640] sm:$0xff]
    %v602 = vld [vmem:[#allocation2 + $0x648] sm:$0xff]
    %v603 = vld [vmem:[#allocation2 + $0x650] sm:$0xff]
    %v604 = vld [vmem:[#allocation2 + $0x658] sm:$0xff]
    %v605 = vld [vmem:[#allocation2 + $0x660] sm:$0xff]
    %v606 = vld [vmem:[#allocation2 + $0x668] sm:$0xff]
    %v607 = vld [vmem:[#allocation2 + $0x670] sm:$0xff]
    %v608 = vld [vmem:[#allocation2 + $0x678] sm:$0xff]
    %v609 = vld [vmem:[#allocation2 + $0x680] sm:$0xff]
    %v610 = vld [vmem:[#allocation2 + $0x688] sm:$0xff]
    %v611 = vld [vmem:[#allocation2 + $0x690] sm:$0xff]
    %v612 = vld [vmem:[#allocation2 + $0x698] sm:$0xff]
    %v613 = vld [vmem:[#allocation2 + $0x6a0] sm:$0xff]
    %v614 = vld [vmem:[#allocation2 + $0x6a8] sm:$0xff]
    %v615 = vld [vmem:[#allocation2 + $0x6b0] sm:$0xff]
    %v616 = vld [vmem:[#allocation2 + $0x6b8] sm:$0xff]
    %v617 = vld [vmem:[#allocation2 + $0x6c0] sm:$0xff]
    %v618 = vld [vmem:[#allocation2 + $0x6c8] sm:$0xff]
    %v619 = vld [vmem:[#allocation2 + $0x6d0] sm:$0xff]
    %v620 = vld [vmem:[#allocation2 + $0x6d8] sm:$0xff]
    %v621 = vld [vmem:[#allocation2 + $0x6e0] sm:$0xff]
    %v622 = vld [vmem:[#allocation2 + $0x6e8] sm:$0xff]
    %v623 = vld [vmem:[#allocation2 + $0x6f0] sm:$0xff]
    %v624 = vld [vmem:[#allocation2 + $0x6f8] sm:$0xff]
    %v625 = vld [vmem:[#allocation2 + $0x700] sm:$0xff]
    %v626 = vld [vmem:[#allocation2 + $0x708] sm:$0xff]
    %v627 = vld [vmem:[#allocation2 + $0x710] sm:$0xff]
    %v628 = vld [vmem:[#allocation2 + $0x718] sm:$0xff]
    %v629 = vld [vmem:[#allocation2 + $0x720] sm:$0xff]
    %v630 = vld [vmem:[#allocation2 + $0x728] sm:$0xff]
    %v631 = vld [vmem:[#allocation2 + $0x730] sm:$0xff]
    %v632 = vld [vmem:[#allocation2 + $0x738] sm:$0xff]
    %v633 = vld [vmem:[#allocation2 + $0x740] sm:$0xff]
    %v634 = vld [vmem:[#allocation2 + $0x748] sm:$0xff]
    %v635 = vld [vmem:[#allocation2 + $0x750] sm:$0xff]
    %v636 = vld [vmem:[#allocation2 + $0x758] sm:$0xff]
    %v637 = vld [vmem:[#allocation2 + $0x760] sm:$0xff]
    %v638 = vld [vmem:[#allocation2 + $0x768] sm:$0xff]
    %v639 = vld [vmem:[#allocation2 + $0x770] sm:$0xff]
    %v640 = vld [vmem:[#allocation2 + $0x778] sm:$0xff]
    %v641 = vld [vmem:[#allocation2 + $0x780] sm:$0xff]
    %v642 = vld [vmem:[#allocation2 + $0x788] sm:$0xff]
    %v643 = vld [vmem:[#allocation2 + $0x790] sm:$0xff]
    %v644 = vld [vmem:[#allocation2 + $0x798] sm:$0xff]
    %v645 = vld [vmem:[#allocation2 + $0x7a0] sm:$0xff]
    %v646 = vld [vmem:[#allocation2 + $0x7a8] sm:$0xff]
    %v647 = vld [vmem:[#allocation2 + $0x7b0] sm:$0xff]
    %v648 = vld [vmem:[#allocation2 + $0x7b8] sm:$0xff]
    %v649 = vld [vmem:[#allocation2 + $0x7c0] sm:$0xff]
    %v650 = vld [vmem:[#allocation2 + $0x7c8] sm:$0xff]
    %v651 = vld [vmem:[#allocation2 + $0x7d0] sm:$0xff]
    %v652 = vld [vmem:[#allocation2 + $0x7d8] sm:$0xff]
    %v653 = vld [vmem:[#allocation2 + $0x7e0] sm:$0xff]
    %v654 = vld [vmem:[#allocation2 + $0x7e8] sm:$0xff]
    %v655 = vld [vmem:[#allocation2 + $0x7f0] sm:$0xff]
    %v656 = vld [vmem:[#allocation2 + $0x7f8] sm:$0xff]
    %v657 = vld [vmem:[%s4] sm:$0xf]
    %v659 = vlaneseq
    %v660 = vshrl.u32 %v659, 7
    %v661 = vsub.s32 0, %v660
    %v662 = vrot.slane %v657, %v661
    %v663 = vlaneseq
    %v664 = vshrl.u32 %v663, 7
    %v665 = vsub.s32 1, %v664
    %v666 = vrot.slane %v657, %v665
    %v667 = vlaneseq
    %v668 = vshrl.u32 %v667, 7
    %v669 = vsub.s32 2, %v668
    %v670 = vrot.slane %v657, %v669
    %v671 = vlaneseq
    %v672 = vshrl.u32 %v671, 7
    %v673 = vsub.s32 3, %v672
    %v674 = vrot.slane %v657, %v673
    %v935 = vunpack.c.l.b16 %v401
    %v936 = vunpack.c.h.b16 %v401
    %v937 = vunpack.c.l.b16 %v402
    %v938 = vunpack.c.h.b16 %v402
    %v939 = vunpack.c.l.b16 %v403
    %v940 = vunpack.c.h.b16 %v403
    %v941 = vunpack.c.l.b16 %v404
    %v942 = vunpack.c.h.b16 %v404
    %v943 = vunpack.c.l.b16 %v405
    %v944 = vunpack.c.h.b16 %v405
    %v945 = vunpack.c.l.b16 %v406
    %v946 = vunpack.c.h.b16 %v406
    %v947 = vunpack.c.l.b16 %v407
    %v948 = vunpack.c.h.b16 %v407
    %v949 = vunpack.c.l.b16 %v408
    %v950 = vunpack.c.h.b16 %v408
    %v951 = vunpack.c.l.b16 %v409
    %v952 = vunpack.c.h.b16 %v409
    %v953 = vunpack.c.l.b16 %v410
    %v954 = vunpack.c.h.b16 %v410
    %v955 = vunpack.c.l.b16 %v411
    %v956 = vunpack.c.h.b16 %v411
    %v957 = vunpack.c.l.b16 %v412
    %v958 = vunpack.c.h.b16 %v412
    %v959 = vunpack.c.l.b16 %v413
    %v960 = vunpack.c.h.b16 %v413
    %v961 = vunpack.c.l.b16 %v414
    %v962 = vunpack.c.h.b16 %v414
    %v963 = vunpack.c.l.b16 %v415
    %v964 = vunpack.c.h.b16 %v415
    %v965 = vunpack.c.l.b16 %v416
    %v966 = vunpack.c.h.b16 %v416
    %v967 = vunpack.c.l.b16 %v417
    %v968 = vunpack.c.h.b16 %v417
    %v969 = vunpack.c.l.b16 %v418
    %v970 = vunpack.c.h.b16 %v418
    %v971 = vunpack.c.l.b16 %v419
    %v972 = vunpack.c.h.b16 %v419
    %v973 = vunpack.c.l.b16 %v420
    %v974 = vunpack.c.h.b16 %v420
    %v975 = vunpack.c.l.b16 %v421
    %v976 = vunpack.c.h.b16 %v421
    %v977 = vunpack.c.l.b16 %v422
    %v978 = vunpack.c.h.b16 %v422
    %v979 = vunpack.c.l.b16 %v423
    %v980 = vunpack.c.h.b16 %v423
    %v981 = vunpack.c.l.b16 %v424
    %v982 = vunpack.c.h.b16 %v424
    %v983 = vunpack.c.l.b16 %v425
    %v984 = vunpack.c.h.b16 %v425
    %v985 = vunpack.c.l.b16 %v426
    %v986 = vunpack.c.h.b16 %v426
    %v987 = vunpack.c.l.b16 %v427
    %v988 = vunpack.c.h.b16 %v427
    %v989 = vunpack.c.l.b16 %v428
    %v990 = vunpack.c.h.b16 %v428
    %v991 = vunpack.c.l.b16 %v429
    %v992 = vunpack.c.h.b16 %v429
    %v993 = vunpack.c.l.b16 %v430
    %v994 = vunpack.c.h.b16 %v430
    %v995 = vunpack.c.l.b16 %v431
    %v996 = vunpack.c.h.b16 %v431
    %v997 = vunpack.c.l.b16 %v432
    %v998 = vunpack.c.h.b16 %v432
    %v999 = vunpack.c.l.b16 %v433
    %v1000 = vunpack.c.h.b16 %v433
    %v1001 = vunpack.c.l.b16 %v434
    %v1002 = vunpack.c.h.b16 %v434
    %v1003 = vunpack.c.l.b16 %v435
    %v1004 = vunpack.c.h.b16 %v435
    %v1005 = vunpack.c.l.b16 %v436
    %v1006 = vunpack.c.h.b16 %v436
    %v1007 = vunpack.c.l.b16 %v437
    %v1008 = vunpack.c.h.b16 %v437
    %v1009 = vunpack.c.l.b16 %v438
    %v1010 = vunpack.c.h.b16 %v438
    %v1011 = vunpack.c.l.b16 %v439
    %v1012 = vunpack.c.h.b16 %v439
    %v1013 = vunpack.c.l.b16 %v440
    %v1014 = vunpack.c.h.b16 %v440
    %v1015 = vunpack.c.l.b16 %v441
    %v1016 = vunpack.c.h.b16 %v441
    %v1017 = vunpack.c.l.b16 %v442
    %v1018 = vunpack.c.h.b16 %v442
    %v1019 = vunpack.c.l.b16 %v443
    %v1020 = vunpack.c.h.b16 %v443
    %v1021 = vunpack.c.l.b16 %v444
    %v1022 = vunpack.c.h.b16 %v444
    %v1023 = vunpack.c.l.b16 %v445
    %v1024 = vunpack.c.h.b16 %v445
    %v1025 = vunpack.c.l.b16 %v446
    %v1026 = vunpack.c.h.b16 %v446
    %v1027 = vunpack.c.l.b16 %v447
    %v1028 = vunpack.c.h.b16 %v447
    %v1029 = vunpack.c.l.b16 %v448
    %v1030 = vunpack.c.h.b16 %v448
    %v1031 = vunpack.c.l.b16 %v449
    %v1032 = vunpack.c.h.b16 %v449
    %v1033 = vunpack.c.l.b16 %v450
    %v1034 = vunpack.c.h.b16 %v450
    %v1035 = vunpack.c.l.b16 %v451
    %v1036 = vunpack.c.h.b16 %v451
    %v1037 = vunpack.c.l.b16 %v452
    %v1038 = vunpack.c.h.b16 %v452
    %v1039 = vunpack.c.l.b16 %v453
    %v1040 = vunpack.c.h.b16 %v453
    %v1041 = vunpack.c.l.b16 %v454
    %v1042 = vunpack.c.h.b16 %v454
    %v1043 = vunpack.c.l.b16 %v455
    %v1044 = vunpack.c.h.b16 %v455
    %v1045 = vunpack.c.l.b16 %v456
    %v1046 = vunpack.c.h.b16 %v456
    %v1047 = vunpack.c.l.b16 %v457
    %v1048 = vunpack.c.h.b16 %v457
    %v1049 = vunpack.c.l.b16 %v458
    %v1050 = vunpack.c.h.b16 %v458
    %v1051 = vunpack.c.l.b16 %v459
    %v1052 = vunpack.c.h.b16 %v459
    %v1053 = vunpack.c.l.b16 %v460
    %v1054 = vunpack.c.h.b16 %v460
    %v1055 = vunpack.c.l.b16 %v461
    %v1056 = vunpack.c.h.b16 %v461
    %v1057 = vunpack.c.l.b16 %v462
    %v1058 = vunpack.c.h.b16 %v462
    %v1059 = vunpack.c.l.b16 %v463
    %v1060 = vunpack.c.h.b16 %v463
    %v1061 = vunpack.c.l.b16 %v464
    %v1062 = vunpack.c.h.b16 %v464
    %v1063 = vunpack.c.l.b16 %v465
    %v1064 = vunpack.c.h.b16 %v465
    %v1065 = vunpack.c.l.b16 %v466
    %v1066 = vunpack.c.h.b16 %v466
    %v1067 = vunpack.c.l.b16 %v467
    %v1068 = vunpack.c.h.b16 %v467
    %v1069 = vunpack.c.l.b16 %v468
    %v1070 = vunpack.c.h.b16 %v468
    %v1071 = vunpack.c.l.b16 %v469
    %v1072 = vunpack.c.h.b16 %v469
    %v1073 = vunpack.c.l.b16 %v470
    %v1074 = vunpack.c.h.b16 %v470
    %v1075 = vunpack.c.l.b16 %v471
    %v1076 = vunpack.c.h.b16 %v471
    %v1077 = vunpack.c.l.b16 %v472
    %v1078 = vunpack.c.h.b16 %v472
    %v1079 = vunpack.c.l.b16 %v473
    %v1080 = vunpack.c.h.b16 %v473
    %v1081 = vunpack.c.l.b16 %v474
    %v1082 = vunpack.c.h.b16 %v474
    %v1083 = vunpack.c.l.b16 %v475
    %v1084 = vunpack.c.h.b16 %v475
    %v1085 = vunpack.c.l.b16 %v476
    %v1086 = vunpack.c.h.b16 %v476
    %v1087 = vunpack.c.l.b16 %v477
    %v1088 = vunpack.c.h.b16 %v477
    %v1089 = vunpack.c.l.b16 %v478
    %v1090 = vunpack.c.h.b16 %v478
    %v1091 = vunpack.c.l.b16 %v479
    %v1092 = vunpack.c.h.b16 %v479
    %v1093 = vunpack.c.l.b16 %v480
    %v1094 = vunpack.c.h.b16 %v480
    %v1095 = vunpack.c.l.b16 %v481
    %v1096 = vunpack.c.h.b16 %v481
    %v1097 = vunpack.c.l.b16 %v482
    %v1098 = vunpack.c.h.b16 %v482
    %v1099 = vunpack.c.l.b16 %v483
    %v1100 = vunpack.c.h.b16 %v483
    %v1101 = vunpack.c.l.b16 %v484
    %v1102 = vunpack.c.h.b16 %v484
    %v1103 = vunpack.c.l.b16 %v485
    %v1104 = vunpack.c.h.b16 %v485
    %v1105 = vunpack.c.l.b16 %v486
    %v1106 = vunpack.c.h.b16 %v486
    %v1107 = vunpack.c.l.b16 %v487
    %v1108 = vunpack.c.h.b16 %v487
    %v1109 = vunpack.c.l.b16 %v488
    %v1110 = vunpack.c.h.b16 %v488
    %v1111 = vunpack.c.l.b16 %v489
    %v1112 = vunpack.c.h.b16 %v489
    %v1113 = vunpack.c.l.b16 %v490
    %v1114 = vunpack.c.h.b16 %v490
    %v1115 = vunpack.c.l.b16 %v491
    %v1116 = vunpack.c.h.b16 %v491
    %v1117 = vunpack.c.l.b16 %v492
    %v1118 = vunpack.c.h.b16 %v492
    %v1119 = vunpack.c.l.b16 %v493
    %v1120 = vunpack.c.h.b16 %v493
    %v1121 = vunpack.c.l.b16 %v494
    %v1122 = vunpack.c.h.b16 %v494
    %v1123 = vunpack.c.l.b16 %v495
    %v1124 = vunpack.c.h.b16 %v495
    %v1125 = vunpack.c.l.b16 %v496
    %v1126 = vunpack.c.h.b16 %v496
    %v1127 = vunpack.c.l.b16 %v497
    %v1128 = vunpack.c.h.b16 %v497
    %v1129 = vunpack.c.l.b16 %v498
    %v1130 = vunpack.c.h.b16 %v498
    %v1131 = vunpack.c.l.b16 %v499
    %v1132 = vunpack.c.h.b16 %v499
    %v1133 = vunpack.c.l.b16 %v500
    %v1134 = vunpack.c.h.b16 %v500
    %v1135 = vunpack.c.l.b16 %v501
    %v1136 = vunpack.c.h.b16 %v501
    %v1137 = vunpack.c.l.b16 %v502
    %v1138 = vunpack.c.h.b16 %v502
    %v1139 = vunpack.c.l.b16 %v503
    %v1140 = vunpack.c.h.b16 %v503
    %v1141 = vunpack.c.l.b16 %v504
    %v1142 = vunpack.c.h.b16 %v504
    %v1143 = vunpack.c.l.b16 %v505
    %v1144 = vunpack.c.h.b16 %v505
    %v1145 = vunpack.c.l.b16 %v506
    %v1146 = vunpack.c.h.b16 %v506
    %v1147 = vunpack.c.l.b16 %v507
    %v1148 = vunpack.c.h.b16 %v507
    %v1149 = vunpack.c.l.b16 %v508
    %v1150 = vunpack.c.h.b16 %v508
    %v1151 = vunpack.c.l.b16 %v509
    %v1152 = vunpack.c.h.b16 %v509
    %v1153 = vunpack.c.l.b16 %v510
    %v1154 = vunpack.c.h.b16 %v510
    %v1155 = vunpack.c.l.b16 %v511
    %v1156 = vunpack.c.h.b16 %v511
    %v1157 = vunpack.c.l.b16 %v512
    %v1158 = vunpack.c.h.b16 %v512
    %v1159 = vunpack.c.l.b16 %v513
    %v1160 = vunpack.c.h.b16 %v513
    %v1161 = vunpack.c.l.b16 %v514
    %v1162 = vunpack.c.h.b16 %v514
    %v1163 = vunpack.c.l.b16 %v515
    %v1164 = vunpack.c.h.b16 %v515
    %v1165 = vunpack.c.l.b16 %v516
    %v1166 = vunpack.c.h.b16 %v516
    %v1167 = vunpack.c.l.b16 %v517
    %v1168 = vunpack.c.h.b16 %v517
    %v1169 = vunpack.c.l.b16 %v518
    %v1170 = vunpack.c.h.b16 %v518
    %v1171 = vunpack.c.l.b16 %v519
    %v1172 = vunpack.c.h.b16 %v519
    %v1173 = vunpack.c.l.b16 %v520
    %v1174 = vunpack.c.h.b16 %v520
    %v1175 = vunpack.c.l.b16 %v521
    %v1176 = vunpack.c.h.b16 %v521
    %v1177 = vunpack.c.l.b16 %v522
    %v1178 = vunpack.c.h.b16 %v522
    %v1179 = vunpack.c.l.b16 %v523
    %v1180 = vunpack.c.h.b16 %v523
    %v1181 = vunpack.c.l.b16 %v524
    %v1182 = vunpack.c.h.b16 %v524
    %v1183 = vunpack.c.l.b16 %v525
    %v1184 = vunpack.c.h.b16 %v525
    %v1185 = vunpack.c.l.b16 %v526
    %v1186 = vunpack.c.h.b16 %v526
    %v1187 = vunpack.c.l.b16 %v527
    %v1188 = vunpack.c.h.b16 %v527
    %v1189 = vunpack.c.l.b16 %v528
    %v1190 = vunpack.c.h.b16 %v528
    %v1191 = vunpack.c.l.b16 %v529
    %v1192 = vunpack.c.h.b16 %v529
    %v1193 = vunpack.c.l.b16 %v530
    %v1194 = vunpack.c.h.b16 %v530
    %v1195 = vunpack.c.l.b16 %v531
    %v1196 = vunpack.c.h.b16 %v531
    %v1197 = vunpack.c.l.b16 %v532
    %v1198 = vunpack.c.h.b16 %v532
    %v1199 = vunpack.c.l.b16 %v533
    %v1200 = vunpack.c.h.b16 %v533
    %v1201 = vunpack.c.l.b16 %v534
    %v1202 = vunpack.c.h.b16 %v534
    %v1203 = vunpack.c.l.b16 %v535
    %v1204 = vunpack.c.h.b16 %v535
    %v1205 = vunpack.c.l.b16 %v536
    %v1206 = vunpack.c.h.b16 %v536
    %v1207 = vunpack.c.l.b16 %v537
    %v1208 = vunpack.c.h.b16 %v537
    %v1209 = vunpack.c.l.b16 %v538
    %v1210 = vunpack.c.h.b16 %v538
    %v1211 = vunpack.c.l.b16 %v539
    %v1212 = vunpack.c.h.b16 %v539
    %v1213 = vunpack.c.l.b16 %v540
    %v1214 = vunpack.c.h.b16 %v540
    %v1215 = vunpack.c.l.b16 %v541
    %v1216 = vunpack.c.h.b16 %v541
    %v1217 = vunpack.c.l.b16 %v542
    %v1218 = vunpack.c.h.b16 %v542
    %v1219 = vunpack.c.l.b16 %v543
    %v1220 = vunpack.c.h.b16 %v543
    %v1221 = vunpack.c.l.b16 %v544
    %v1222 = vunpack.c.h.b16 %v544
    %v1223 = vunpack.c.l.b16 %v545
    %v1224 = vunpack.c.h.b16 %v545
    %v1225 = vunpack.c.l.b16 %v546
    %v1226 = vunpack.c.h.b16 %v546
    %v1227 = vunpack.c.l.b16 %v547
    %v1228 = vunpack.c.h.b16 %v547
    %v1229 = vunpack.c.l.b16 %v548
    %v1230 = vunpack.c.h.b16 %v548
    %v1231 = vunpack.c.l.b16 %v549
    %v1232 = vunpack.c.h.b16 %v549
    %v1233 = vunpack.c.l.b16 %v550
    %v1234 = vunpack.c.h.b16 %v550
    %v1235 = vunpack.c.l.b16 %v551
    %v1236 = vunpack.c.h.b16 %v551
    %v1237 = vunpack.c.l.b16 %v552
    %v1238 = vunpack.c.h.b16 %v552
    %v1239 = vunpack.c.l.b16 %v553
    %v1240 = vunpack.c.h.b16 %v553
    %v1241 = vunpack.c.l.b16 %v554
    %v1242 = vunpack.c.h.b16 %v554
    %v1243 = vunpack.c.l.b16 %v555
    %v1244 = vunpack.c.h.b16 %v555
    %v1245 = vunpack.c.l.b16 %v556
    %v1246 = vunpack.c.h.b16 %v556
    %v1247 = vunpack.c.l.b16 %v557
    %v1248 = vunpack.c.h.b16 %v557
    %v1249 = vunpack.c.l.b16 %v558
    %v1250 = vunpack.c.h.b16 %v558
    %v1251 = vunpack.c.l.b16 %v559
    %v1252 = vunpack.c.h.b16 %v559
    %v1253 = vunpack.c.l.b16 %v560
    %v1254 = vunpack.c.h.b16 %v560
    %v1255 = vunpack.c.l.b16 %v561
    %v1256 = vunpack.c.h.b16 %v561
    %v1257 = vunpack.c.l.b16 %v562
    %v1258 = vunpack.c.h.b16 %v562
    %v1259 = vunpack.c.l.b16 %v563
    %v1260 = vunpack.c.h.b16 %v563
    %v1261 = vunpack.c.l.b16 %v564
    %v1262 = vunpack.c.h.b16 %v564
    %v1263 = vunpack.c.l.b16 %v565
    %v1264 = vunpack.c.h.b16 %v565
    %v1265 = vunpack.c.l.b16 %v566
    %v1266 = vunpack.c.h.b16 %v566
    %v1267 = vunpack.c.l.b16 %v567
    %v1268 = vunpack.c.h.b16 %v567
    %v1269 = vunpack.c.l.b16 %v568
    %v1270 = vunpack.c.h.b16 %v568
    %v1271 = vunpack.c.l.b16 %v569
    %v1272 = vunpack.c.h.b16 %v569
    %v1273 = vunpack.c.l.b16 %v570
    %v1274 = vunpack.c.h.b16 %v570
    %v1275 = vunpack.c.l.b16 %v571
    %v1276 = vunpack.c.h.b16 %v571
    %v1277 = vunpack.c.l.b16 %v572
    %v1278 = vunpack.c.h.b16 %v572
    %v1279 = vunpack.c.l.b16 %v573
    %v1280 = vunpack.c.h.b16 %v573
    %v1281 = vunpack.c.l.b16 %v574
    %v1282 = vunpack.c.h.b16 %v574
    %v1283 = vunpack.c.l.b16 %v575
    %v1284 = vunpack.c.h.b16 %v575
    %v1285 = vunpack.c.l.b16 %v576
    %v1286 = vunpack.c.h.b16 %v576
    %v1287 = vunpack.c.l.b16 %v577
    %v1288 = vunpack.c.h.b16 %v577
    %v1289 = vunpack.c.l.b16 %v578
    %v1290 = vunpack.c.h.b16 %v578
    %v1291 = vunpack.c.l.b16 %v579
    %v1292 = vunpack.c.h.b16 %v579
    %v1293 = vunpack.c.l.b16 %v580
    %v1294 = vunpack.c.h.b16 %v580
    %v1295 = vunpack.c.l.b16 %v581
    %v1296 = vunpack.c.h.b16 %v581
    %v1297 = vunpack.c.l.b16 %v582
    %v1298 = vunpack.c.h.b16 %v582
    %v1299 = vunpack.c.l.b16 %v583
    %v1300 = vunpack.c.h.b16 %v583
    %v1301 = vunpack.c.l.b16 %v584
    %v1302 = vunpack.c.h.b16 %v584
    %v1303 = vunpack.c.l.b16 %v585
    %v1304 = vunpack.c.h.b16 %v585
    %v1305 = vunpack.c.l.b16 %v586
    %v1306 = vunpack.c.h.b16 %v586
    %v1307 = vunpack.c.l.b16 %v587
    %v1308 = vunpack.c.h.b16 %v587
    %v1309 = vunpack.c.l.b16 %v588
    %v1310 = vunpack.c.h.b16 %v588
    %v1311 = vunpack.c.l.b16 %v589
    %v1312 = vunpack.c.h.b16 %v589
    %v1313 = vunpack.c.l.b16 %v590
    %v1314 = vunpack.c.h.b16 %v590
    %v1315 = vunpack.c.l.b16 %v591
    %v1316 = vunpack.c.h.b16 %v591
    %v1317 = vunpack.c.l.b16 %v592
    %v1318 = vunpack.c.h.b16 %v592
    %v1319 = vunpack.c.l.b16 %v593
    %v1320 = vunpack.c.h.b16 %v593
    %v1321 = vunpack.c.l.b16 %v594
    %v1322 = vunpack.c.h.b16 %v594
    %v1323 = vunpack.c.l.b16 %v595
    %v1324 = vunpack.c.h.b16 %v595
    %v1325 = vunpack.c.l.b16 %v596
    %v1326 = vunpack.c.h.b16 %v596
    %v1327 = vunpack.c.l.b16 %v597
    %v1328 = vunpack.c.h.b16 %v597
    %v1329 = vunpack.c.l.b16 %v598
    %v1330 = vunpack.c.h.b16 %v598
    %v1331 = vunpack.c.l.b16 %v599
    %v1332 = vunpack.c.h.b16 %v599
    %v1333 = vunpack.c.l.b16 %v600
    %v1334 = vunpack.c.h.b16 %v600
    %v1335 = vunpack.c.l.b16 %v601
    %v1336 = vunpack.c.h.b16 %v601
    %v1337 = vunpack.c.l.b16 %v602
    %v1338 = vunpack.c.h.b16 %v602
    %v1339 = vunpack.c.l.b16 %v603
    %v1340 = vunpack.c.h.b16 %v603
    %v1341 = vunpack.c.l.b16 %v604
    %v1342 = vunpack.c.h.b16 %v604
    %v1343 = vunpack.c.l.b16 %v605
    %v1344 = vunpack.c.h.b16 %v605
    %v1345 = vunpack.c.l.b16 %v606
    %v1346 = vunpack.c.h.b16 %v606
    %v1347 = vunpack.c.l.b16 %v607
    %v1348 = vunpack.c.h.b16 %v607
    %v1349 = vunpack.c.l.b16 %v608
    %v1350 = vunpack.c.h.b16 %v608
    %v1351 = vunpack.c.l.b16 %v609
    %v1352 = vunpack.c.h.b16 %v609
    %v1353 = vunpack.c.l.b16 %v610
    %v1354 = vunpack.c.h.b16 %v610
    %v1355 = vunpack.c.l.b16 %v611
    %v1356 = vunpack.c.h.b16 %v611
    %v1357 = vunpack.c.l.b16 %v612
    %v1358 = vunpack.c.h.b16 %v612
    %v1359 = vunpack.c.l.b16 %v613
    %v1360 = vunpack.c.h.b16 %v613
    %v1361 = vunpack.c.l.b16 %v614
    %v1362 = vunpack.c.h.b16 %v614
    %v1363 = vunpack.c.l.b16 %v615
    %v1364 = vunpack.c.h.b16 %v615
    %v1365 = vunpack.c.l.b16 %v616
    %v1366 = vunpack.c.h.b16 %v616
    %v1367 = vunpack.c.l.b16 %v617
    %v1368 = vunpack.c.h.b16 %v617
    %v1369 = vunpack.c.l.b16 %v618
    %v1370 = vunpack.c.h.b16 %v618
    %v1371 = vunpack.c.l.b16 %v619
    %v1372 = vunpack.c.h.b16 %v619
    %v1373 = vunpack.c.l.b16 %v620
    %v1374 = vunpack.c.h.b16 %v620
    %v1375 = vunpack.c.l.b16 %v621
    %v1376 = vunpack.c.h.b16 %v621
    %v1377 = vunpack.c.l.b16 %v622
    %v1378 = vunpack.c.h.b16 %v622
    %v1379 = vunpack.c.l.b16 %v623
    %v1380 = vunpack.c.h.b16 %v623
    %v1381 = vunpack.c.l.b16 %v624
    %v1382 = vunpack.c.h.b16 %v624
    %v1383 = vunpack.c.l.b16 %v625
    %v1384 = vunpack.c.h.b16 %v625
    %v1385 = vunpack.c.l.b16 %v626
    %v1386 = vunpack.c.h.b16 %v626
    %v1387 = vunpack.c.l.b16 %v627
    %v1388 = vunpack.c.h.b16 %v627
    %v1389 = vunpack.c.l.b16 %v628
    %v1390 = vunpack.c.h.b16 %v628
    %v1391 = vunpack.c.l.b16 %v629
    %v1392 = vunpack.c.h.b16 %v629
    %v1393 = vunpack.c.l.b16 %v630
    %v1394 = vunpack.c.h.b16 %v630
    %v1395 = vunpack.c.l.b16 %v631
    %v1396 = vunpack.c.h.b16 %v631
    %v1397 = vunpack.c.l.b16 %v632
    %v1398 = vunpack.c.h.b16 %v632
    %v1399 = vunpack.c.l.b16 %v633
    %v1400 = vunpack.c.h.b16 %v633
    %v1401 = vunpack.c.l.b16 %v634
    %v1402 = vunpack.c.h.b16 %v634
    %v1403 = vunpack.c.l.b16 %v635
    %v1404 = vunpack.c.h.b16 %v635
    %v1405 = vunpack.c.l.b16 %v636
    %v1406 = vunpack.c.h.b16 %v636
    %v1407 = vunpack.c.l.b16 %v637
    %v1408 = vunpack.c.h.b16 %v637
    %v1409 = vunpack.c.l.b16 %v638
    %v1410 = vunpack.c.h.b16 %v638
    %v1411 = vunpack.c.l.b16 %v639
    %v1412 = vunpack.c.h.b16 %v639
    %v1413 = vunpack.c.l.b16 %v640
    %v1414 = vunpack.c.h.b16 %v640
    %v1415 = vunpack.c.l.b16 %v641
    %v1416 = vunpack.c.h.b16 %v641
    %v1417 = vunpack.c.l.b16 %v642
    %v1418 = vunpack.c.h.b16 %v642
    %v1419 = vunpack.c.l.b16 %v643
    %v1420 = vunpack.c.h.b16 %v643
    %v1421 = vunpack.c.l.b16 %v644
    %v1422 = vunpack.c.h.b16 %v644
    %v1423 = vunpack.c.l.b16 %v645
    %v1424 = vunpack.c.h.b16 %v645
    %v1425 = vunpack.c.l.b16 %v646
    %v1426 = vunpack.c.h.b16 %v646
    %v1427 = vunpack.c.l.b16 %v647
    %v1428 = vunpack.c.h.b16 %v647
    %v1429 = vunpack.c.l.b16 %v648
    %v1430 = vunpack.c.h.b16 %v648
    %v1431 = vunpack.c.l.b16 %v649
    %v1432 = vunpack.c.h.b16 %v649
    %v1433 = vunpack.c.l.b16 %v650
    %v1434 = vunpack.c.h.b16 %v650
    %v1435 = vunpack.c.l.b16 %v651
    %v1436 = vunpack.c.h.b16 %v651
    %v1437 = vunpack.c.l.b16 %v652
    %v1438 = vunpack.c.h.b16 %v652
    %v1439 = vunpack.c.l.b16 %v653
    %v1440 = vunpack.c.h.b16 %v653
    %v1441 = vunpack.c.l.b16 %v654
    %v1442 = vunpack.c.h.b16 %v654
    %v1443 = vunpack.c.l.b16 %v655
    %v1444 = vunpack.c.h.b16 %v655
    %v1445 = vunpack.c.l.b16 %v656
    %v1446 = vunpack.c.h.b16 %v656
    %v1447 = vpack.c.b16 %v939, %v935
    %v1448 = vpack.c.b16 %v940, %v936
    %v1449 = vpack.c.b16 %v941, %v937
    %v1450 = vpack.c.b16 %v942, %v938
    %v1451 = vpack.c.b16 %v947, %v943
    %v1452 = vpack.c.b16 %v948, %v944
    %v1453 = vpack.c.b16 %v949, %v945
    %v1454 = vpack.c.b16 %v950, %v946
    %v1455 = vpack.c.b16 %v955, %v951
    %v1456 = vpack.c.b16 %v956, %v952
    %v1457 = vpack.c.b16 %v957, %v953
    %v1458 = vpack.c.b16 %v958, %v954
    %v1459 = vpack.c.b16 %v963, %v959
    %v1460 = vpack.c.b16 %v964, %v960
    %v1461 = vpack.c.b16 %v965, %v961
    %v1462 = vpack.c.b16 %v966, %v962
    %v1463 = vpack.c.b16 %v971, %v967
    %v1464 = vpack.c.b16 %v972, %v968
    %v1465 = vpack.c.b16 %v973, %v969
    %v1466 = vpack.c.b16 %v974, %v970
    %v1467 = vpack.c.b16 %v979, %v975
    %v1468 = vpack.c.b16 %v980, %v976
    %v1469 = vpack.c.b16 %v981, %v977
    %v1470 = vpack.c.b16 %v982, %v978
    %v1471 = vpack.c.b16 %v987, %v983
    %v1472 = vpack.c.b16 %v988, %v984
    %v1473 = vpack.c.b16 %v989, %v985
    %v1474 = vpack.c.b16 %v990, %v986
    %v1475 = vpack.c.b16 %v995, %v991
    %v1476 = vpack.c.b16 %v996, %v992
    %v1477 = vpack.c.b16 %v997, %v993
    %v1478 = vpack.c.b16 %v998, %v994
    %v1479 = vpack.c.b16 %v1003, %v999
    %v1480 = vpack.c.b16 %v1004, %v1000
    %v1481 = vpack.c.b16 %v1005, %v1001
    %v1482 = vpack.c.b16 %v1006, %v1002
    %v1483 = vpack.c.b16 %v1011, %v1007
    %v1484 = vpack.c.b16 %v1012, %v1008
    %v1485 = vpack.c.b16 %v1013, %v1009
    %v1486 = vpack.c.b16 %v1014, %v1010
    %v1487 = vpack.c.b16 %v1019, %v1015
    %v1488 = vpack.c.b16 %v1020, %v1016
    %v1489 = vpack.c.b16 %v1021, %v1017
    %v1490 = vpack.c.b16 %v1022, %v1018
    %v1491 = vpack.c.b16 %v1027, %v1023
    %v1492 = vpack.c.b16 %v1028, %v1024
    %v1493 = vpack.c.b16 %v1029, %v1025
    %v1494 = vpack.c.b16 %v1030, %v1026
    %v1495 = vpack.c.b16 %v1035, %v1031
    %v1496 = vpack.c.b16 %v1036, %v1032
    %v1497 = vpack.c.b16 %v1037, %v1033
    %v1498 = vpack.c.b16 %v1038, %v1034
    %v1499 = vpack.c.b16 %v1043, %v1039
    %v1500 = vpack.c.b16 %v1044, %v1040
    %v1501 = vpack.c.b16 %v1045, %v1041
    %v1502 = vpack.c.b16 %v1046, %v1042
    %v1503 = vpack.c.b16 %v1051, %v1047
    %v1504 = vpack.c.b16 %v1052, %v1048
    %v1505 = vpack.c.b16 %v1053, %v1049
    %v1506 = vpack.c.b16 %v1054, %v1050
    %v1507 = vpack.c.b16 %v1059, %v1055
    %v1508 = vpack.c.b16 %v1060, %v1056
    %v1509 = vpack.c.b16 %v1061, %v1057
    %v1510 = vpack.c.b16 %v1062, %v1058
    %v1511 = vpack.c.b16 %v1067, %v1063
    %v1512 = vpack.c.b16 %v1068, %v1064
    %v1513 = vpack.c.b16 %v1069, %v1065
    %v1514 = vpack.c.b16 %v1070, %v1066
    %v1515 = vpack.c.b16 %v1075, %v1071
    %v1516 = vpack.c.b16 %v1076, %v1072
    %v1517 = vpack.c.b16 %v1077, %v1073
    %v1518 = vpack.c.b16 %v1078, %v1074
    %v1519 = vpack.c.b16 %v1083, %v1079
    %v1520 = vpack.c.b16 %v1084, %v1080
    %v1521 = vpack.c.b16 %v1085, %v1081
    %v1522 = vpack.c.b16 %v1086, %v1082
    %v1523 = vpack.c.b16 %v1091, %v1087
    %v1524 = vpack.c.b16 %v1092, %v1088
    %v1525 = vpack.c.b16 %v1093, %v1089
    %v1526 = vpack.c.b16 %v1094, %v1090
    %v1527 = vpack.c.b16 %v1099, %v1095
    %v1528 = vpack.c.b16 %v1100, %v1096
    %v1529 = vpack.c.b16 %v1101, %v1097
    %v1530 = vpack.c.b16 %v1102, %v1098
    %v1531 = vpack.c.b16 %v1107, %v1103
    %v1532 = vpack.c.b16 %v1108, %v1104
    %v1533 = vpack.c.b16 %v1109, %v1105
    %v1534 = vpack.c.b16 %v1110, %v1106
    %v1535 = vpack.c.b16 %v1115, %v1111
    %v1536 = vpack.c.b16 %v1116, %v1112
    %v1537 = vpack.c.b16 %v1117, %v1113
    %v1538 = vpack.c.b16 %v1118, %v1114
    %v1539 = vpack.c.b16 %v1123, %v1119
    %v1540 = vpack.c.b16 %v1124, %v1120
    %v1541 = vpack.c.b16 %v1125, %v1121
    %v1542 = vpack.c.b16 %v1126, %v1122
    %v1543 = vpack.c.b16 %v1131, %v1127
    %v1544 = vpack.c.b16 %v1132, %v1128
    %v1545 = vpack.c.b16 %v1133, %v1129
    %v1546 = vpack.c.b16 %v1134, %v1130
    %v1547 = vpack.c.b16 %v1139, %v1135
    %v1548 = vpack.c.b16 %v1140, %v1136
    %v1549 = vpack.c.b16 %v1141, %v1137
    %v1550 = vpack.c.b16 %v1142, %v1138
    %v1551 = vpack.c.b16 %v1147, %v1143
    %v1552 = vpack.c.b16 %v1148, %v1144
    %v1553 = vpack.c.b16 %v1149, %v1145
    %v1554 = vpack.c.b16 %v1150, %v1146
    %v1555 = vpack.c.b16 %v1155, %v1151
    %v1556 = vpack.c.b16 %v1156, %v1152
    %v1557 = vpack.c.b16 %v1157, %v1153
    %v1558 = vpack.c.b16 %v1158, %v1154
    %v1559 = vpack.c.b16 %v1163, %v1159
    %v1560 = vpack.c.b16 %v1164, %v1160
    %v1561 = vpack.c.b16 %v1165, %v1161
    %v1562 = vpack.c.b16 %v1166, %v1162
    %v1563 = vpack.c.b16 %v1171, %v1167
    %v1564 = vpack.c.b16 %v1172, %v1168
    %v1565 = vpack.c.b16 %v1173, %v1169
    %v1566 = vpack.c.b16 %v1174, %v1170
    %v1567 = vpack.c.b16 %v1179, %v1175
    %v1568 = vpack.c.b16 %v1180, %v1176
    %v1569 = vpack.c.b16 %v1181, %v1177
    %v1570 = vpack.c.b16 %v1182, %v1178
    %v1571 = vpack.c.b16 %v1187, %v1183
    %v1572 = vpack.c.b16 %v1188, %v1184
    %v1573 = vpack.c.b16 %v1189, %v1185
    %v1574 = vpack.c.b16 %v1190, %v1186
    %v1575 = vpack.c.b16 %v1195, %v1191
    %v1576 = vpack.c.b16 %v1196, %v1192
    %v1577 = vpack.c.b16 %v1197, %v1193
    %v1578 = vpack.c.b16 %v1198, %v1194
    %v1579 = vpack.c.b16 %v1203, %v1199
    %v1580 = vpack.c.b16 %v1204, %v1200
    %v1581 = vpack.c.b16 %v1205, %v1201
    %v1582 = vpack.c.b16 %v1206, %v1202
    %v1583 = vpack.c.b16 %v1211, %v1207
    %v1584 = vpack.c.b16 %v1212, %v1208
    %v1585 = vpack.c.b16 %v1213, %v1209
    %v1586 = vpack.c.b16 %v1214, %v1210
    %v1587 = vpack.c.b16 %v1219, %v1215
    %v1588 = vpack.c.b16 %v1220, %v1216
    %v1589 = vpack.c.b16 %v1221, %v1217
    %v1590 = vpack.c.b16 %v1222, %v1218
    %v1591 = vpack.c.b16 %v1227, %v1223
    %v1592 = vpack.c.b16 %v1228, %v1224
    %v1593 = vpack.c.b16 %v1229, %v1225
    %v1594 = vpack.c.b16 %v1230, %v1226
    %v1595 = vpack.c.b16 %v1235, %v1231
    %v1596 = vpack.c.b16 %v1236, %v1232
    %v1597 = vpack.c.b16 %v1237, %v1233
    %v1598 = vpack.c.b16 %v1238, %v1234
    %v1599 = vpack.c.b16 %v1243, %v1239
    %v1600 = vpack.c.b16 %v1244, %v1240
    %v1601 = vpack.c.b16 %v1245, %v1241
    %v1602 = vpack.c.b16 %v1246, %v1242
    %v1603 = vpack.c.b16 %v1251, %v1247
    %v1604 = vpack.c.b16 %v1252, %v1248
    %v1605 = vpack.c.b16 %v1253, %v1249
    %v1606 = vpack.c.b16 %v1254, %v1250
    %v1607 = vpack.c.b16 %v1259, %v1255
    %v1608 = vpack.c.b16 %v1260, %v1256
    %v1609 = vpack.c.b16 %v1261, %v1257
    %v1610 = vpack.c.b16 %v1262, %v1258
    %v1611 = vpack.c.b16 %v1267, %v1263
    %v1612 = vpack.c.b16 %v1268, %v1264
    %v1613 = vpack.c.b16 %v1269, %v1265
    %v1614 = vpack.c.b16 %v1270, %v1266
    %v1615 = vpack.c.b16 %v1275, %v1271
    %v1616 = vpack.c.b16 %v1276, %v1272
    %v1617 = vpack.c.b16 %v1277, %v1273
    %v1618 = vpack.c.b16 %v1278, %v1274
    %v1619 = vpack.c.b16 %v1283, %v1279
    %v1620 = vpack.c.b16 %v1284, %v1280
    %v1621 = vpack.c.b16 %v1285, %v1281
    %v1622 = vpack.c.b16 %v1286, %v1282
    %v1623 = vpack.c.b16 %v1291, %v1287
    %v1624 = vpack.c.b16 %v1292, %v1288
    %v1625 = vpack.c.b16 %v1293, %v1289
    %v1626 = vpack.c.b16 %v1294, %v1290
    %v1627 = vpack.c.b16 %v1299, %v1295
    %v1628 = vpack.c.b16 %v1300, %v1296
    %v1629 = vpack.c.b16 %v1301, %v1297
    %v1630 = vpack.c.b16 %v1302, %v1298
    %v1631 = vpack.c.b16 %v1307, %v1303
    %v1632 = vpack.c.b16 %v1308, %v1304
    %v1633 = vpack.c.b16 %v1309, %v1305
    %v1634 = vpack.c.b16 %v1310, %v1306
    %v1635 = vpack.c.b16 %v1315, %v1311
    %v1636 = vpack.c.b16 %v1316, %v1312
    %v1637 = vpack.c.b16 %v1317, %v1313
    %v1638 = vpack.c.b16 %v1318, %v1314
    %v1639 = vpack.c.b16 %v1323, %v1319
    %v1640 = vpack.c.b16 %v1324, %v1320
    %v1641 = vpack.c.b16 %v1325, %v1321
    %v1642 = vpack.c.b16 %v1326, %v1322
    %v1643 = vpack.c.b16 %v1331, %v1327
    %v1644 = vpack.c.b16 %v1332, %v1328
    %v1645 = vpack.c.b16 %v1333, %v1329
    %v1646 = vpack.c.b16 %v1334, %v1330
    %v1647 = vpack.c.b16 %v1339, %v1335
    %v1648 = vpack.c.b16 %v1340, %v1336
    %v1649 = vpack.c.b16 %v1341, %v1337
    %v1650 = vpack.c.b16 %v1342, %v1338
    %v1651 = vpack.c.b16 %v1347, %v1343
    %v1652 = vpack.c.b16 %v1348, %v1344
    %v1653 = vpack.c.b16 %v1349, %v1345
    %v1654 = vpack.c.b16 %v1350, %v1346
    %v1655 = vpack.c.b16 %v1355, %v1351
    %v1656 = vpack.c.b16 %v1356, %v1352
    %v1657 = vpack.c.b16 %v1357, %v1353
    %v1658 = vpack.c.b16 %v1358, %v1354
    %v1659 = vpack.c.b16 %v1363, %v1359
    %v1660 = vpack.c.b16 %v1364, %v1360
    %v1661 = vpack.c.b16 %v1365, %v1361
    %v1662 = vpack.c.b16 %v1366, %v1362
    %v1663 = vpack.c.b16 %v1371, %v1367
    %v1664 = vpack.c.b16 %v1372, %v1368
    %v1665 = vpack.c.b16 %v1373, %v1369
    %v1666 = vpack.c.b16 %v1374, %v1370
    %v1667 = vpack.c.b16 %v1379, %v1375
    %v1668 = vpack.c.b16 %v1380, %v1376
    %v1669 = vpack.c.b16 %v1381, %v1377
    %v1670 = vpack.c.b16 %v1382, %v1378
    %v1671 = vpack.c.b16 %v1387, %v1383
    %v1672 = vpack.c.b16 %v1388, %v1384
    %v1673 = vpack.c.b16 %v1389, %v1385
    %v1674 = vpack.c.b16 %v1390, %v1386
    %v1675 = vpack.c.b16 %v1395, %v1391
    %v1676 = vpack.c.b16 %v1396, %v1392
    %v1677 = vpack.c.b16 %v1397, %v1393
    %v1678 = vpack.c.b16 %v1398, %v1394
    %v1679 = vpack.c.b16 %v1403, %v1399
    %v1680 = vpack.c.b16 %v1404, %v1400
    %v1681 = vpack.c.b16 %v1405, %v1401
    %v1682 = vpack.c.b16 %v1406, %v1402
    %v1683 = vpack.c.b16 %v1411, %v1407
    %v1684 = vpack.c.b16 %v1412, %v1408
    %v1685 = vpack.c.b16 %v1413, %v1409
    %v1686 = vpack.c.b16 %v1414, %v1410
    %v1687 = vpack.c.b16 %v1419, %v1415
    %v1688 = vpack.c.b16 %v1420, %v1416
    %v1689 = vpack.c.b16 %v1421, %v1417
    %v1690 = vpack.c.b16 %v1422, %v1418
    %v1691 = vpack.c.b16 %v1427, %v1423
    %v1692 = vpack.c.b16 %v1428, %v1424
    %v1693 = vpack.c.b16 %v1429, %v1425
    %v1694 = vpack.c.b16 %v1430, %v1426
    %v1695 = vpack.c.b16 %v1435, %v1431
    %v1696 = vpack.c.b16 %v1436, %v1432
    %v1697 = vpack.c.b16 %v1437, %v1433
    %v1698 = vpack.c.b16 %v1438, %v1434
    %v1699 = vpack.c.b16 %v1443, %v1439
    %v1700 = vpack.c.b16 %v1444, %v1440
    %v1701 = vpack.c.b16 %v1445, %v1441
    %v1702 = vpack.c.b16 %v1446, %v1442
    %1959 = vmatprep.subr.bf16.mxu0 %v1448
    %1960 = vmatpush1.bf16.msra.mxu0 %v1447
    %1961 = vmatprep.subr.bf16.mxu0 %v1452
    %1962 = vmatpush1.bf16.msra.mxu0 %v1451
    %1963 = vmatprep.subr.bf16.mxu0 %v1456
    %1964 = vmatpush1.bf16.msra.mxu0 %v1455
    %1965 = vmatprep.subr.bf16.mxu0 %v1460
    %1966 = vmatpush1.bf16.msra.mxu0 %v1459
    %1967 = vmatprep.subr.bf16.mxu0 %v1464
    %1968 = vmatpush1.bf16.msra.mxu0 %v1463
    %1969 = vmatprep.subr.bf16.mxu0 %v1468
    %1970 = vmatpush1.bf16.msra.mxu0 %v1467
    %1971 = vmatprep.subr.bf16.mxu0 %v1472
    %1972 = vmatpush1.bf16.msra.mxu0 %v1471
    %1973 = vmatprep.subr.bf16.mxu0 %v1476
    %1974 = vmatpush1.bf16.msra.mxu0 %v1475
    %1975 = vmatprep.subr.bf16.mxu0 %v1480
    %1976 = vmatpush1.bf16.msra.mxu0 %v1479
    %1977 = vmatprep.subr.bf16.mxu0 %v1484
    %1978 = vmatpush1.bf16.msra.mxu0 %v1483
    %1979 = vmatprep.subr.bf16.mxu0 %v1488
    %1980 = vmatpush1.bf16.msra.mxu0 %v1487
    %1981 = vmatprep.subr.bf16.mxu0 %v1492
    %1982 = vmatpush1.bf16.msra.mxu0 %v1491
    %1983 = vmatprep.subr.bf16.mxu0 %v1496
    %1984 = vmatpush1.bf16.msra.mxu0 %v1495
    %1985 = vmatprep.subr.bf16.mxu0 %v1500
    %1986 = vmatpush1.bf16.msra.mxu0 %v1499
    %1987 = vmatprep.subr.bf16.mxu0 %v1504
    %1988 = vmatpush1.bf16.msra.mxu0 %v1503
    %1989 = vmatprep.subr.bf16.mxu0 %v1508
    %1990 = vmatpush1.bf16.msra.mxu0 %v1507
    %1991 = vmatprep.mubr.bf16.mxu0 %v394
    %1992 = vmatmul.mubr.bf16.gmra.mrb[0].mxu0 %v393
    %v1993 = vpop.f32.mrb[0].mxu0
    %v1994 = vadd.f32 %v662, %v1993
    %v1995 = vpop.f32.mrb[0].mxu0
    %v1996 = vadd.f32 %v666, %v1995
    %v1997 = vpop.f32.mrb[0].mxu0
    %v1998 = vpop.f32.mrb[0].mxu0
    %1999 = vdwg.mxu0
    %2000 = vmatprep.subr.bf16.mxu0 %v1512
    %2001 = vmatpush1.bf16.msra.mxu0 %v1511
    %2002 = vmatprep.subr.bf16.mxu0 %v1516
    %2003 = vmatpush1.bf16.msra.mxu0 %v1515
    %2004 = vmatprep.subr.bf16.mxu0 %v1520
    %2005 = vmatpush1.bf16.msra.mxu0 %v1519
    %2006 = vmatprep.subr.bf16.mxu0 %v1524
    %2007 = vmatpush1.bf16.msra.mxu0 %v1523
    %2008 = vmatprep.subr.bf16.mxu0 %v1528
    %2009 = vmatpush1.bf16.msra.mxu0 %v1527
    %2010 = vmatprep.subr.bf16.mxu0 %v1532
    %2011 = vmatpush1.bf16.msra.mxu0 %v1531
    %2012 = vmatprep.subr.bf16.mxu0 %v1536
    %2013 = vmatpush1.bf16.msra.mxu0 %v1535
    %2014 = vmatprep.subr.bf16.mxu0 %v1540
    %2015 = vmatpush1.bf16.msra.mxu0 %v1539
    %2016 = vmatprep.subr.bf16.mxu0 %v1544
    %2017 = vmatpush1.bf16.msra.mxu0 %v1543
    %2018 = vmatprep.subr.bf16.mxu0 %v1548
    %2019 = vmatpush1.bf16.msra.mxu0 %v1547
    %2020 = vmatprep.subr.bf16.mxu0 %v1552
    %2021 = vmatpush1.bf16.msra.mxu0 %v1551
    %2022 = vmatprep.subr.bf16.mxu0 %v1556
    %2023 = vmatpush1.bf16.msra.mxu0 %v1555
    %2024 = vmatprep.subr.bf16.mxu0 %v1560
    %2025 = vmatpush1.bf16.msra.mxu0 %v1559
    %2026 = vmatprep.subr.bf16.mxu0 %v1564
    %2027 = vmatpush1.bf16.msra.mxu0 %v1563
    %2028 = vmatprep.subr.bf16.mxu0 %v1568
    %2029 = vmatpush1.bf16.msra.mxu0 %v1567
    %2030 = vmatprep.subr.bf16.mxu0 %v1572
    %2031 = vmatpush1.bf16.msra.mxu0 %v1571
    %2032 = vmatprep.mubr.bf16.mxu0 %v396
    %2033 = vmatmul.mubr.bf16.gmra.mrb[0].mxu0 %v395
    %v2034 = vpop.f32.mrb[0].mxu0
    %v2035 = vadd.f32 %v1994, %v2034
    %v2036 = vpop.f32.mrb[0].mxu0
    %v2037 = vadd.f32 %v1996, %v2036
    %v2038 = vpop.f32.mrb[0].mxu0
    %v2039 = vpop.f32.mrb[0].mxu0
    %2040 = vdwg.mxu0
    %2041 = vmatprep.subr.bf16.mxu0 %v1576
    %2042 = vmatpush1.bf16.msra.mxu0 %v1575
    %2043 = vmatprep.subr.bf16.mxu0 %v1580
    %2044 = vmatpush1.bf16.msra.mxu0 %v1579
    %2045 = vmatprep.subr.bf16.mxu0 %v1584
    %2046 = vmatpush1.bf16.msra.mxu0 %v1583
    %2047 = vmatprep.subr.bf16.mxu0 %v1588
    %2048 = vmatpush1.bf16.msra.mxu0 %v1587
    %2049 = vmatprep.subr.bf16.mxu0 %v1592
    %2050 = vmatpush1.bf16.msra.mxu0 %v1591
    %2051 = vmatprep.subr.bf16.mxu0 %v1596
    %2052 = vmatpush1.bf16.msra.mxu0 %v1595
    %2053 = vmatprep.subr.bf16.mxu0 %v1600
    %2054 = vmatpush1.bf16.msra.mxu0 %v1599
    %2055 = vmatprep.subr.bf16.mxu0 %v1604
    %2056 = vmatpush1.bf16.msra.mxu0 %v1603
    %2057 = vmatprep.subr.bf16.mxu0 %v1608
    %2058 = vmatpush1.bf16.msra.mxu0 %v1607
    %2059 = vmatprep.subr.bf16.mxu0 %v1612
    %2060 = vmatpush1.bf16.msra.mxu0 %v1611
    %2061 = vmatprep.subr.bf16.mxu0 %v1616
    %2062 = vmatpush1.bf16.msra.mxu0 %v1615
    %2063 = vmatprep.subr.bf16.mxu0 %v1620
    %2064 = vmatpush1.bf16.msra.mxu0 %v1619
    %2065 = vmatprep.subr.bf16.mxu0 %v1624
    %2066 = vmatpush1.bf16.msra.mxu0 %v1623
    %2067 = vmatprep.subr.bf16.mxu0 %v1628
    %2068 = vmatpush1.bf16.msra.mxu0 %v1627
    %2069 = vmatprep.subr.bf16.mxu0 %v1632
    %2070 = vmatpush1.bf16.msra.mxu0 %v1631
    %2071 = vmatprep.subr.bf16.mxu0 %v1636
    %2072 = vmatpush1.bf16.msra.mxu0 %v1635
    %2073 = vmatprep.mubr.bf16.mxu0 %v398
    %2074 = vmatmul.mubr.bf16.gmra.mrb[0].mxu0 %v397
    %v2075 = vpop.f32.mrb[0].mxu0
    %v2076 = vadd.f32 %v2035, %v2075
    %v2077 = vpop.f32.mrb[0].mxu0
    %v2078 = vadd.f32 %v2037, %v2077
    %v2079 = vpop.f32.mrb[0].mxu0
    %v2080 = vpop.f32.mrb[0].mxu0
    %2081 = vdwg.mxu0
    %2082 = vmatprep.subr.bf16.mxu0 %v1640
    %2083 = vmatpush1.bf16.msra.mxu0 %v1639
    %2084 = vmatprep.subr.bf16.mxu0 %v1644
    %2085 = vmatpush1.bf16.msra.mxu0 %v1643
    %2086 = vmatprep.subr.bf16.mxu0 %v1648
    %2087 = vmatpush1.bf16.msra.mxu0 %v1647
    %2088 = vmatprep.subr.bf16.mxu0 %v1652
    %2089 = vmatpush1.bf16.msra.mxu0 %v1651
    %2090 = vmatprep.subr.bf16.mxu0 %v1656
    %2091 = vmatpush1.bf16.msra.mxu0 %v1655
    %2092 = vmatprep.subr.bf16.mxu0 %v1660
    %2093 = vmatpush1.bf16.msra.mxu0 %v1659
    %2094 = vmatprep.subr.bf16.mxu0 %v1664
    %2095 = vmatpush1.bf16.msra.mxu0 %v1663
    %2096 = vmatprep.subr.bf16.mxu0 %v1668
    %2097 = vmatpush1.bf16.msra.mxu0 %v1667
    %2098 = vmatprep.subr.bf16.mxu0 %v1672
    %2099 = vmatpush1.bf16.msra.mxu0 %v1671
    %2100 = vmatprep.subr.bf16.mxu0 %v1676
    %2101 = vmatpush1.bf16.msra.mxu0 %v1675
    %2102 = vmatprep.subr.bf16.mxu0 %v1680
    %2103 = vmatpush1.bf16.msra.mxu0 %v1679
    %2104 = vmatprep.subr.bf16.mxu0 %v1684
    %2105 = vmatpush1.bf16.msra.mxu0 %v1683
    %2106 = vmatprep.subr.bf16.mxu0 %v1688
    %2107 = vmatpush1.bf16.msra.mxu0 %v1687
    %2108 = vmatprep.subr.bf16.mxu0 %v1692
    %2109 = vmatpush1.bf16.msra.mxu0 %v1691
    %2110 = vmatprep.subr.bf16.mxu0 %v1696
    %2111 = vmatpush1.bf16.msra.mxu0 %v1695
    %2112 = vmatprep.subr.bf16.mxu0 %v1700
    %2113 = vmatpush1.bf16.msra.mxu0 %v1699
    %2114 = vmatprep.mubr.bf16.mxu0 %v400
    %2115 = vmatmul.mubr.bf16.gmra.mrb[0].mxu0 %v399
    %v2116 = vpop.f32.mrb[0].mxu0
    %v2117 = vadd.f32 %v2076, %v2116
    %v2118 = vpop.f32.mrb[0].mxu0
    %v2119 = vadd.f32 %v2078, %v2118
    %v2120 = vpop.f32.mrb[0].mxu0
    %v2121 = vpop.f32.mrb[0].mxu0
    %2122 = vdwg.mxu0
    %2123 = vmatprep.subr.bf16.mxu0 %v1450
    %2124 = vmatpush1.bf16.msra.mxu0 %v1449
    %2125 = vmatprep.subr.bf16.mxu0 %v1454
    %2126 = vmatpush1.bf16.msra.mxu0 %v1453
    %2127 = vmatprep.subr.bf16.mxu0 %v1458
    %2128 = vmatpush1.bf16.msra.mxu0 %v1457
    %2129 = vmatprep.subr.bf16.mxu0 %v1462
    %2130 = vmatpush1.bf16.msra.mxu0 %v1461
    %2131 = vmatprep.subr.bf16.mxu0 %v1466
    %2132 = vmatpush1.bf16.msra.mxu0 %v1465
    %2133 = vmatprep.subr.bf16.mxu0 %v1470
    %2134 = vmatpush1.bf16.msra.mxu0 %v1469
    %2135 = vmatprep.subr.bf16.mxu0 %v1474
    %2136 = vmatpush1.bf16.msra.mxu0 %v1473
    %2137 = vmatprep.subr.bf16.mxu0 %v1478
    %2138 = vmatpush1.bf16.msra.mxu0 %v1477
    %2139 = vmatprep.subr.bf16.mxu0 %v1482
    %2140 = vmatpush1.bf16.msra.mxu0 %v1481
    %2141 = vmatprep.subr.bf16.mxu0 %v1486
    %2142 = vmatpush1.bf16.msra.mxu0 %v1485
    %2143 = vmatprep.subr.bf16.mxu0 %v1490
    %2144 = vmatpush1.bf16.msra.mxu0 %v1489
    %2145 = vmatprep.subr.bf16.mxu0 %v1494
    %2146 = vmatpush1.bf16.msra.mxu0 %v1493
    %2147 = vmatprep.subr.bf16.mxu0 %v1498
    %2148 = vmatpush1.bf16.msra.mxu0 %v1497
    %2149 = vmatprep.subr.bf16.mxu0 %v1502
    %2150 = vmatpush1.bf16.msra.mxu0 %v1501
    %2151 = vmatprep.subr.bf16.mxu0 %v1506
    %2152 = vmatpush1.bf16.msra.mxu0 %v1505
    %2153 = vmatprep.subr.bf16.mxu0 %v1510
    %2154 = vmatpush1.bf16.msra.mxu0 %v1509
    %2155 = vmatprep.mubr.bf16.mxu0 %v394
    %2156 = vmatmul.mubr.bf16.gmra.mrb[0].mxu0 %v393
    %v2157 = vpop.f32.mrb[0].mxu0
    %v2158 = vadd.f32 %v670, %v2157
    %v2159 = vpop.f32.mrb[0].mxu0
    %v2160 = vadd.f32 %v674, %v2159
    %v2161 = vpop.f32.mrb[0].mxu0
    %v2162 = vpop.f32.mrb[0].mxu0
    %2163 = vdwg.mxu0
    %2164 = vmatprep.subr.bf16.mxu0 %v1514
    %2165 = vmatpush1.bf16.msra.mxu0 %v1513
    %2166 = vmatprep.subr.bf16.mxu0 %v1518
    %2167 = vmatpush1.bf16.msra.mxu0 %v1517
    %2168 = vmatprep.subr.bf16.mxu0 %v1522
    %2169 = vmatpush1.bf16.msra.mxu0 %v1521
    %2170 = vmatprep.subr.bf16.mxu0 %v1526
    %2171 = vmatpush1.bf16.msra.mxu0 %v1525
    %2172 = vmatprep.subr.bf16.mxu0 %v1530
    %2173 = vmatpush1.bf16.msra.mxu0 %v1529
    %2174 = vmatprep.subr.bf16.mxu0 %v1534
    %2175 = vmatpush1.bf16.msra.mxu0 %v1533
    %2176 = vmatprep.subr.bf16.mxu0 %v1538
    %2177 = vmatpush1.bf16.msra.mxu0 %v1537
    %2178 = vmatprep.subr.bf16.mxu0 %v1542
    %2179 = vmatpush1.bf16.msra.mxu0 %v1541
    %2180 = vmatprep.subr.bf16.mxu0 %v1546
    %2181 = vmatpush1.bf16.msra.mxu0 %v1545
    %2182 = vmatprep.subr.bf16.mxu0 %v1550
    %2183 = vmatpush1.bf16.msra.mxu0 %v1549
    %2184 = vmatprep.subr.bf16.mxu0 %v1554
    %2185 = vmatpush1.bf16.msra.mxu0 %v1553
    %2186 = vmatprep.subr.bf16.mxu0 %v1558
    %2187 = vmatpush1.bf16.msra.mxu0 %v1557
    %2188 = vmatprep.subr.bf16.mxu0 %v1562
    %2189 = vmatpush1.bf16.msra.mxu0 %v1561
    %2190 = vmatprep.subr.bf16.mxu0 %v1566
    %2191 = vmatpush1.bf16.msra.mxu0 %v1565
    %2192 = vmatprep.subr.bf16.mxu0 %v1570
    %2193 = vmatpush1.bf16.msra.mxu0 %v1569
    %2194 = vmatprep.subr.bf16.mxu0 %v1574
    %2195 = vmatpush1.bf16.msra.mxu0 %v1573
    %2196 = vmatprep.mubr.bf16.mxu0 %v396
    %2197 = vmatmul.mubr.bf16.gmra.mrb[0].mxu0 %v395
    %v2198 = vpop.f32.mrb[0].mxu0
    %v2199 = vadd.f32 %v2158, %v2198
    %v2200 = vpop.f32.mrb[0].mxu0
    %v2201 = vadd.f32 %v2160, %v2200
    %v2202 = vpop.f32.mrb[0].mxu0
    %v2203 = vpop.f32.mrb[0].mxu0
    %2204 = vdwg.mxu0
    %2205 = vmatprep.subr.bf16.mxu0 %v1578
    %2206 = vmatpush1.bf16.msra.mxu0 %v1577
    %2207 = vmatprep.subr.bf16.mxu0 %v1582
    %2208 = vmatpush1.bf16.msra.mxu0 %v1581
    %2209 = vmatprep.subr.bf16.mxu0 %v1586
    %2210 = vmatpush1.bf16.msra.mxu0 %v1585
    %2211 = vmatprep.subr.bf16.mxu0 %v1590
    %2212 = vmatpush1.bf16.msra.mxu0 %v1589
    %2213 = vmatprep.subr.bf16.mxu0 %v1594
    %2214 = vmatpush1.bf16.msra.mxu0 %v1593
    %2215 = vmatprep.subr.bf16.mxu0 %v1598
    %2216 = vmatpush1.bf16.msra.mxu0 %v1597
    %2217 = vmatprep.subr.bf16.mxu0 %v1602
    %2218 = vmatpush1.bf16.msra.mxu0 %v1601
    %2219 = vmatprep.subr.bf16.mxu0 %v1606
    %2220 = vmatpush1.bf16.msra.mxu0 %v1605
    %2221 = vmatprep.subr.bf16.mxu0 %v1610
    %2222 = vmatpush1.bf16.msra.mxu0 %v1609
    %2223 = vmatprep.subr.bf16.mxu0 %v1614
    %2224 = vmatpush1.bf16.msra.mxu0 %v1613
    %2225 = vmatprep.subr.bf16.mxu0 %v1618
    %2226 = vmatpush1.bf16.msra.mxu0 %v1617
    %2227 = vmatprep.subr.bf16.mxu0 %v1622
    %2228 = vmatpush1.bf16.msra.mxu0 %v1621
    %2229 = vmatprep.subr.bf16.mxu0 %v1626
    %2230 = vmatpush1.bf16.msra.mxu0 %v1625
    %2231 = vmatprep.subr.bf16.mxu0 %v1630
    %2232 = vmatpush1.bf16.msra.mxu0 %v1629
    %2233 = vmatprep.subr.bf16.mxu0 %v1634
    %2234 = vmatpush1.bf16.msra.mxu0 %v1633
    %2235 = vmatprep.subr.bf16.mxu0 %v1638
    %2236 = vmatpush1.bf16.msra.mxu0 %v1637
    %2237 = vmatprep.mubr.bf16.mxu0 %v398
    %2238 = vmatmul.mubr.bf16.gmra.mrb[0].mxu0 %v397
    %v2239 = vpop.f32.mrb[0].mxu0
    %v2240 = vadd.f32 %v2199, %v2239
    %v2241 = vpop.f32.mrb[0].mxu0
    %v2242 = vadd.f32 %v2201, %v2241
    %v2243 = vpop.f32.mrb[0].mxu0
    %v2244 = vpop.f32.mrb[0].mxu0
    %2245 = vdwg.mxu0
    %2246 = vmatprep.subr.bf16.mxu0 %v1642
    %2247 = vmatpush1.bf16.msra.mxu0 %v1641
    %2248 = vmatprep.subr.bf16.mxu0 %v1646
    %2249 = vmatpush1.bf16.msra.mxu0 %v1645
    %2250 = vmatprep.subr.bf16.mxu0 %v1650
    %2251 = vmatpush1.bf16.msra.mxu0 %v1649
    %2252 = vmatprep.subr.bf16.mxu0 %v1654
    %2253 = vmatpush1.bf16.msra.mxu0 %v1653
    %2254 = vmatprep.subr.bf16.mxu0 %v1658
    %2255 = vmatpush1.bf16.msra.mxu0 %v1657
    %2256 = vmatprep.subr.bf16.mxu0 %v1662
    %2257 = vmatpush1.bf16.msra.mxu0 %v1661
    %2258 = vmatprep.subr.bf16.mxu0 %v1666
    %2259 = vmatpush1.bf16.msra.mxu0 %v1665
    %2260 = vmatprep.subr.bf16.mxu0 %v1670
    %2261 = vmatpush1.bf16.msra.mxu0 %v1669
    %2262 = vmatprep.subr.bf16.mxu0 %v1674
    %2263 = vmatpush1.bf16.msra.mxu0 %v1673
    %2264 = vmatprep.subr.bf16.mxu0 %v1678
    %2265 = vmatpush1.bf16.msra.mxu0 %v1677
    %2266 = vmatprep.subr.bf16.mxu0 %v1682
    %2267 = vmatpush1.bf16.msra.mxu0 %v1681
    %2268 = vmatprep.subr.bf16.mxu0 %v1686
    %2269 = vmatpush1.bf16.msra.mxu0 %v1685
    %2270 = vmatprep.subr.bf16.mxu0 %v1690
    %2271 = vmatpush1.bf16.msra.mxu0 %v1689
    %2272 = vmatprep.subr.bf16.mxu0 %v1694
    %2273 = vmatpush1.bf16.msra.mxu0 %v1693
    %2274 = vmatprep.subr.bf16.mxu0 %v1698
    %2275 = vmatpush1.bf16.msra.mxu0 %v1697
    %2276 = vmatprep.subr.bf16.mxu0 %v1702
    %2277 = vmatpush1.bf16.msra.mxu0 %v1701
    %2278 = vmatprep.mubr.bf16.mxu0 %v400
    %2279 = vmatmul.mubr.bf16.gmra.mrb[0].mxu0 %v399
    %v2280 = vpop.f32.mrb[0].mxu0
    %v2281 = vadd.f32 %v2240, %v2280
    %v2282 = vpop.f32.mrb[0].mxu0
    %v2283 = vadd.f32 %v2242, %v2282
    %v2284 = vpop.f32.mrb[0].mxu0
    %v2285 = vpop.f32.mrb[0].mxu0
    %2286 = vdwg.mxu0
    %v2287 = vmax.f32 %v2117, 0.0
    %v2288 = vmax.f32 %v2119, 0.0
    %v2289 = vmax.f32 %v2281, 0.0
    %v2290 = vmax.f32 %v2283, 0.0
    %v2291 = vpack.c.bf16 %v2287, %v2287
    %v2292 = vpack.c.bf16 %v2288, %v2288
    %v2293 = vpack.c.bf16 %v2289, %v2289
    %v2294 = vpack.c.bf16 %v2290, %v2290
    %v2295 = vld [vmem:[%s5] sm:$0xf]
    %v2296 = vld [vmem:[%s5 + $0x4] sm:$0xf]
    %v2297 = vld [vmem:[%s5 + $0x8] sm:$0xf]
    %v2298 = vld [vmem:[%s5 + $0xc] sm:$0xf]
    %v2299 = vld [vmem:[%s5 + $0x10] sm:$0xf]
    %v2300 = vld [vmem:[%s5 + $0x14] sm:$0xf]
    %v2301 = vld [vmem:[%s5 + $0x18] sm:$0xf]
    %v2302 = vld [vmem:[%s5 + $0x1c] sm:$0xf]
    %v2303 = vld [vmem:[%s5 + $0x20] sm:$0xf]
    %v2304 = vld [vmem:[%s5 + $0x24] sm:$0xf]
    %v2305 = vld [vmem:[%s5 + $0x28] sm:$0xf]
    %v2306 = vld [vmem:[%s5 + $0x2c] sm:$0xf]
    %v2307 = vld [vmem:[%s5 + $0x30] sm:$0xf]
    %v2308 = vld [vmem:[%s5 + $0x34] sm:$0xf]
    %v2309 = vld [vmem:[%s5 + $0x38] sm:$0xf]
    %v2310 = vld [vmem:[%s5 + $0x3c] sm:$0xf]
    %v2311 = vld [vmem:[%s5 + $0x40] sm:$0xf]
    %v2312 = vld [vmem:[%s5 + $0x44] sm:$0xf]
    %v2313 = vld [vmem:[%s5 + $0x48] sm:$0xf]
    %v2314 = vld [vmem:[%s5 + $0x4c] sm:$0xf]
    %v2315 = vld [vmem:[%s5 + $0x50] sm:$0xf]
    %v2316 = vld [vmem:[%s5 + $0x54] sm:$0xf]
    %v2317 = vld [vmem:[%s5 + $0x58] sm:$0xf]
    %v2318 = vld [vmem:[%s5 + $0x5c] sm:$0xf]
    %v2319 = vld [vmem:[%s5 + $0x60] sm:$0xf]
    %v2320 = vld [vmem:[%s5 + $0x64] sm:$0xf]
    %v2321 = vld [vmem:[%s5 + $0x68] sm:$0xf]
    %v2322 = vld [vmem:[%s5 + $0x6c] sm:$0xf]
    %v2323 = vld [vmem:[%s5 + $0x70] sm:$0xf]
    %v2324 = vld [vmem:[%s5 + $0x74] sm:$0xf]
    %v2325 = vld [vmem:[%s5 + $0x78] sm:$0xf]
    %v2326 = vld [vmem:[%s5 + $0x7c] sm:$0xf]
    %v2327 = vld [vmem:[%s5 + $0x80] sm:$0xf]
    %v2328 = vld [vmem:[%s5 + $0x84] sm:$0xf]
    %v2329 = vld [vmem:[%s5 + $0x88] sm:$0xf]
    %v2330 = vld [vmem:[%s5 + $0x8c] sm:$0xf]
    %v2331 = vld [vmem:[%s5 + $0x90] sm:$0xf]
    %v2332 = vld [vmem:[%s5 + $0x94] sm:$0xf]
    %v2333 = vld [vmem:[%s5 + $0x98] sm:$0xf]
    %v2334 = vld [vmem:[%s5 + $0x9c] sm:$0xf]
    %v2335 = vld [vmem:[%s5 + $0xa0] sm:$0xf]
    %v2336 = vld [vmem:[%s5 + $0xa4] sm:$0xf]
    %v2337 = vld [vmem:[%s5 + $0xa8] sm:$0xf]
    %v2338 = vld [vmem:[%s5 + $0xac] sm:$0xf]
    %v2339 = vld [vmem:[%s5 + $0xb0] sm:$0xf]
    %v2340 = vld [vmem:[%s5 + $0xb4] sm:$0xf]
    %v2341 = vld [vmem:[%s5 + $0xb8] sm:$0xf]
    %v2342 = vld [vmem:[%s5 + $0xbc] sm:$0xf]
    %v2343 = vld [vmem:[%s5 + $0xc0] sm:$0xf]
    %v2344 = vld [vmem:[%s5 + $0xc4] sm:$0xf]
    %v2345 = vld [vmem:[%s5 + $0xc8] sm:$0xf]
    %v2346 = vld [vmem:[%s5 + $0xcc] sm:$0xf]
    %v2347 = vld [vmem:[%s5 + $0xd0] sm:$0xf]
    %v2348 = vld [vmem:[%s5 + $0xd4] sm:$0xf]
    %v2349 = vld [vmem:[%s5 + $0xd8] sm:$0xf]
    %v2350 = vld [vmem:[%s5 + $0xdc] sm:$0xf]
    %v2351 = vld [vmem:[%s5 + $0xe0] sm:$0xf]
    %v2352 = vld [vmem:[%s5 + $0xe4] sm:$0xf]
    %v2353 = vld [vmem:[%s5 + $0xe8] sm:$0xf]
    %v2354 = vld [vmem:[%s5 + $0xec] sm:$0xf]
    %v2355 = vld [vmem:[%s5 + $0xf0] sm:$0xf]
    %v2356 = vld [vmem:[%s5 + $0xf4] sm:$0xf]
    %v2357 = vld [vmem:[%s5 + $0xf8] sm:$0xf]
    %v2358 = vld [vmem:[%s5 + $0xfc] sm:$0xf]
    %v2359 = vld [vmem:[%s6] sm:$0x1]
    %v2361 = vlaneseq
    %v2362 = vshrl.u32 %v2361, 7
    %v2363 = vsub.s32 0, %v2362
    %v2364 = vrot.slane %v2359, %v2363
    %v2430 = vunpack.c.l.b16 %v2295
    %v2431 = vunpack.c.l.b16 %v2296
    %v2432 = vunpack.c.l.b16 %v2297
    %v2433 = vunpack.c.l.b16 %v2298
    %v2434 = vunpack.c.l.b16 %v2299
    %v2435 = vunpack.c.l.b16 %v2300
    %v2436 = vunpack.c.l.b16 %v2301
    %v2437 = vunpack.c.l.b16 %v2302
    %v2438 = vunpack.c.l.b16 %v2303
    %v2439 = vunpack.c.l.b16 %v2304
    %v2440 = vunpack.c.l.b16 %v2305
    %v2441 = vunpack.c.l.b16 %v2306
    %v2442 = vunpack.c.l.b16 %v2307
    %v2443 = vunpack.c.l.b16 %v2308
    %v2444 = vunpack.c.l.b16 %v2309
    %v2445 = vunpack.c.l.b16 %v2310
    %v2446 = vunpack.c.l.b16 %v2311
    %v2447 = vunpack.c.l.b16 %v2312
    %v2448 = vunpack.c.l.b16 %v2313
    %v2449 = vunpack.c.l.b16 %v2314
    %v2450 = vunpack.c.l.b16 %v2315
    %v2451 = vunpack.c.l.b16 %v2316
    %v2452 = vunpack.c.l.b16 %v2317
    %v2453 = vunpack.c.l.b16 %v2318
    %v2454 = vunpack.c.l.b16 %v2319
    %v2455 = vunpack.c.l.b16 %v2320
    %v2456 = vunpack.c.l.b16 %v2321
    %v2457 = vunpack.c.l.b16 %v2322
    %v2458 = vunpack.c.l.b16 %v2323
    %v2459 = vunpack.c.l.b16 %v2324
    %v2460 = vunpack.c.l.b16 %v2325
    %v2461 = vunpack.c.l.b16 %v2326
    %v2462 = vunpack.c.l.b16 %v2327
    %v2463 = vunpack.c.l.b16 %v2328
    %v2464 = vunpack.c.l.b16 %v2329
    %v2465 = vunpack.c.l.b16 %v2330
    %v2466 = vunpack.c.l.b16 %v2331
    %v2467 = vunpack.c.l.b16 %v2332
    %v2468 = vunpack.c.l.b16 %v2333
    %v2469 = vunpack.c.l.b16 %v2334
    %v2470 = vunpack.c.l.b16 %v2335
    %v2471 = vunpack.c.l.b16 %v2336
    %v2472 = vunpack.c.l.b16 %v2337
    %v2473 = vunpack.c.l.b16 %v2338
    %v2474 = vunpack.c.l.b16 %v2339
    %v2475 = vunpack.c.l.b16 %v2340
    %v2476 = vunpack.c.l.b16 %v2341
    %v2477 = vunpack.c.l.b16 %v2342
    %v2478 = vunpack.c.l.b16 %v2343
    %v2479 = vunpack.c.l.b16 %v2344
    %v2480 = vunpack.c.l.b16 %v2345
    %v2481 = vunpack.c.l.b16 %v2346
    %v2482 = vunpack.c.l.b16 %v2347
    %v2483 = vunpack.c.l.b16 %v2348
    %v2484 = vunpack.c.l.b16 %v2349
    %v2485 = vunpack.c.l.b16 %v2350
    %v2486 = vunpack.c.l.b16 %v2351
    %v2487 = vunpack.c.l.b16 %v2352
    %v2488 = vunpack.c.l.b16 %v2353
    %v2489 = vunpack.c.l.b16 %v2354
    %v2490 = vunpack.c.l.b16 %v2355
    %v2491 = vunpack.c.l.b16 %v2356
    %v2492 = vunpack.c.l.b16 %v2357
    %v2493 = vunpack.c.l.b16 %v2358
    %v2494 = vpack.c.b16 %v2431, %v2430
    %v2495 = vpack.c.b16 %v2433, %v2432
    %v2496 = vpack.c.b16 %v2435, %v2434
    %v2497 = vpack.c.b16 %v2437, %v2436
    %v2498 = vpack.c.b16 %v2439, %v2438
    %v2499 = vpack.c.b16 %v2441, %v2440
    %v2500 = vpack.c.b16 %v2443, %v2442
    %v2501 = vpack.c.b16 %v2445, %v2444
    %v2502 = vpack.c.b16 %v2447, %v2446
    %v2503 = vpack.c.b16 %v2449, %v2448
    %v2504 = vpack.c.b16 %v2451, %v2450
    %v2505 = vpack.c.b16 %v2453, %v2452
    %v2506 = vpack.c.b16 %v2455, %v2454
    %v2507 = vpack.c.b16 %v2457, %v2456
    %v2508 = vpack.c.b16 %v2459, %v2458
    %v2509 = vpack.c.b16 %v2461, %v2460
    %v2510 = vpack.c.b16 %v2463, %v2462
    %v2511 = vpack.c.b16 %v2465, %v2464
    %v2512 = vpack.c.b16 %v2467, %v2466
    %v2513 = vpack.c.b16 %v2469, %v2468
    %v2514 = vpack.c.b16 %v2471, %v2470
    %v2515 = vpack.c.b16 %v2473, %v2472
    %v2516 = vpack.c.b16 %v2475, %v2474
    %v2517 = vpack.c.b16 %v2477, %v2476
    %v2518 = vpack.c.b16 %v2479, %v2478
    %v2519 = vpack.c.b16 %v2481, %v2480
    %v2520 = vpack.c.b16 %v2483, %v2482
    %v2521 = vpack.c.b16 %v2485, %v2484
    %v2522 = vpack.c.b16 %v2487, %v2486
    %v2523 = vpack.c.b16 %v2489, %v2488
    %v2524 = vpack.c.b16 %v2491, %v2490
    %v2525 = vpack.c.b16 %v2493, %v2492
    %2558 = vmatprep.subr.bf16.mxu0 0
    %2559 = vmatpush1.bf16.msra.mxu0 %v2494
    %2560 = vmatprep.subr.bf16.mxu0 0
    %2561 = vmatpush1.bf16.msra.mxu0 %v2495
    %2562 = vmatprep.subr.bf16.mxu0 0
    %2563 = vmatpush1.bf16.msra.mxu0 %v2496
    %2564 = vmatprep.subr.bf16.mxu0 0
    %2565 = vmatpush1.bf16.msra.mxu0 %v2497
    %2566 = vmatprep.subr.bf16.mxu0 0
    %2567 = vmatpush1.bf16.msra.mxu0 %v2498
    %2568 = vmatprep.subr.bf16.mxu0 0
    %2569 = vmatpush1.bf16.msra.mxu0 %v2499
    %2570 = vmatprep.subr.bf16.mxu0 0
    %2571 = vmatpush1.bf16.msra.mxu0 %v2500
    %2572 = vmatprep.subr.bf16.mxu0 0
    %2573 = vmatpush1.bf16.msra.mxu0 %v2501
    %2574 = vmatprep.subr.bf16.mxu0 0
    %2575 = vmatpush1.bf16.msra.mxu0 %v2502
    %2576 = vmatprep.subr.bf16.mxu0 0
    %2577 = vmatpush1.bf16.msra.mxu0 %v2503
    %2578 = vmatprep.subr.bf16.mxu0 0
    %2579 = vmatpush1.bf16.msra.mxu0 %v2504
    %2580 = vmatprep.subr.bf16.mxu0 0
    %2581 = vmatpush1.bf16.msra.mxu0 %v2505
    %2582 = vmatprep.subr.bf16.mxu0 0
    %2583 = vmatpush1.bf16.msra.mxu0 %v2506
    %2584 = vmatprep.subr.bf16.mxu0 0
    %2585 = vmatpush1.bf16.msra.mxu0 %v2507
    %2586 = vmatprep.subr.bf16.mxu0 0
    %2587 = vmatpush1.bf16.msra.mxu0 %v2508
    %2588 = vmatprep.subr.bf16.mxu0 0
    %2589 = vmatpush1.bf16.msra.mxu0 %v2509
    %2590 = vmatprep.mubr.bf16.mxu0 %v2292
    %2591 = vmatmul.mubr.bf16.gmra.mrb[0].mxu0 %v2291
    %v2592 = vpop.f32.mrb[0].mxu0
    %v2593 = vadd.f32 %v2364, %v2592
    %v2594 = vpop.f32.mrb[0].mxu0
    %v2595 = vpop.f32.mrb[0].mxu0
    %v2596 = vpop.f32.mrb[0].mxu0
    %2597 = vdwg.mxu0
    %2598 = vmatprep.subr.bf16.mxu0 0
    %2599 = vmatpush1.bf16.msra.mxu0 %v2510
    %2600 = vmatprep.subr.bf16.mxu0 0
    %2601 = vmatpush1.bf16.msra.mxu0 %v2511
    %2602 = vmatprep.subr.bf16.mxu0 0
    %2603 = vmatpush1.bf16.msra.mxu0 %v2512
    %2604 = vmatprep.subr.bf16.mxu0 0
    %2605 = vmatpush1.bf16.msra.mxu0 %v2513
    %2606 = vmatprep.subr.bf16.mxu0 0
    %2607 = vmatpush1.bf16.msra.mxu0 %v2514
    %2608 = vmatprep.subr.bf16.mxu0 0
    %2609 = vmatpush1.bf16.msra.mxu0 %v2515
    %2610 = vmatprep.subr.bf16.mxu0 0
    %2611 = vmatpush1.bf16.msra.mxu0 %v2516
    %2612 = vmatprep.subr.bf16.mxu0 0
    %2613 = vmatpush1.bf16.msra.mxu0 %v2517
    %2614 = vmatprep.subr.bf16.mxu0 0
    %2615 = vmatpush1.bf16.msra.mxu0 %v2518
    %2616 = vmatprep.subr.bf16.mxu0 0
    %2617 = vmatpush1.bf16.msra.mxu0 %v2519
    %2618 = vmatprep.subr.bf16.mxu0 0
    %2619 = vmatpush1.bf16.msra.mxu0 %v2520
    %2620 = vmatprep.subr.bf16.mxu0 0
    %2621 = vmatpush1.bf16.msra.mxu0 %v2521
    %2622 = vmatprep.subr.bf16.mxu0 0
    %2623 = vmatpush1.bf16.msra.mxu0 %v2522
    %2624 = vmatprep.subr.bf16.mxu0 0
    %2625 = vmatpush1.bf16.msra.mxu0 %v2523
    %2626 = vmatprep.subr.bf16.mxu0 0
    %2627 = vmatpush1.bf16.msra.mxu0 %v2524
    %2628 = vmatprep.subr.bf16.mxu0 0
    %2629 = vmatpush1.bf16.msra.mxu0 %v2525
    %2630 = vmatprep.mubr.bf16.mxu0 %v2294
    %2631 = vmatmul.mubr.bf16.gmra.mrb[0].mxu0 %v2293
    %v2632 = vpop.f32.mrb[0].mxu0
    %v2633 = vadd.f32 %v2593, %v2632
    %v2634 = vpop.f32.mrb[0].mxu0
    %v2635 = vpop.f32.mrb[0].mxu0
    %v2636 = vpop.f32.mrb[0].mxu0
    %2637 = vdwg.mxu0
    %v2638 = vlaneseq
    %v2639 = vand.u32 %v2638, 127
    %v2640 = vmax.f32 %v2633, 0.0
    %v2641 = vsub.f32 0.0, %v2633
    %vm2642 = vcmp.ne.f32.partialorder %v2641, %v2641
    %v2643 = vadd.f32 %v2633, 0.0
    %v2644 = vand.u32 2147483647, %v2641
    %v2645 = vsub.f32 0.0, %v2644
    %v2646 = vmul.f32 %v2645, 1.442695
    %v2647 = vpow.pop %v2646
    %v2648 = vadd.f32 %v2647, 1.0
    %v2649 = vlog2.pop %v2648
    %v2650 = vmul.f32 %v2649, 0.6931472
    %v2651 = vmul.f32 -0.5, %v2647
    %v2652 = vadd.f32 %v2651, 1.0
    %v2653 = vmul.f32 %v2652, %v2647
    %v2654 = vand.u32 2147483647, %v2647
    %vm2655 = vcmp.lt.f32.partialorder %v2654, 0.0004427343
    %v2656 = vsel %vm2655, %v2653, %v2650
    %v2657 = vadd.f32 %v2640, %v2656
    %v2658 = vsel %vm2642, %v2643, %v2657
    %vm2659 = vcmp.lt.s32.totalorder %v2639, 2
    %v2660 = vadd.f32 %v2658, 1e-05
    %v2661 = vsel %vm2659, %v2633, %v2660
    %vm2662 = vcmask 31744
    %2663 = vst.msk [vmem:[%s7] sm:$0xff] %vm2662, %v2661
    // Predicated region
    $region34: #{policy_net_forward.1} parent=1 // pred_check
      _
    $region35: #{policy_net_forward.1} parent=1 // pred_check_branch
      %2665 = sbr.rel (0) target = $region37
    $region36: #{policy_net_forward.1} parent=1 // pred_region
      _
    $region37: #{policy_net_forward.1} parent=1 // pred_fallthru
      _
    // Predicated region
    $region38: #{policy_net_forward.1} parent=1 // pred_check
      _
    $region39: #{policy_net_forward.1} parent=1 // pred_check_branch
      %2667 = sbr.rel (0) target = $region41
    $region40: #{policy_net_forward.1} parent=1 // pred_region
      _
    $region41: #{policy_net_forward.1} parent=1 // pred_fallthru
      _
    %2668 = vsyncpa [#allocation3], 1

</llo_original>
